<compile_context>
chip_gen: v5e
topology: v5e:2x2
jax: 0.10.0
libtpu: 0.0.40
codegen_flags: <defaults>
</compile_context>

<pallas_src>
import jax
import jax.numpy as jnp
from jax.experimental import pallas as pl
from jax.experimental.pallas import tpu as pltpu

# Fixed module hyper-parameters.
K, S = 10, 2          # conv / pool kernel size and stride
C1, C2 = 8, 8         # conv output channels
H1, H2 = 100, 32      # MLP hidden sizes


def _out_len(L):
    return (L - K) // S + 1


def _round_up(n, m):
    return ((n + m - 1) // m) * m


def _hdot(a, b):
    # HIGHEST precision for the small offline weight folds (exactness).
    return jnp.dot(a, b, precision=jax.lax.Precision.HIGHEST)


# --------------------------------------------------------------------------
# Weight-side im2col with CHANNEL-MINOR output columns.
#
#   input rows : r = pos_in * Cin + ci          (position-major, channel-minor)
#   output cols: parity block (even first), inside a block  c = m * Cout + co
#                with conv output position p = 2*m + parity
#
# This makes every MaxPool tap one lane-dense slice of width Cout * P_out.
# --------------------------------------------------------------------------
def _conv_toeplitz_cm(w, b, L_in):
    Cout, Cin, k = w.shape
    L_out = _out_len(L_in)
    n_even = (L_out + 1) // 2
    ncol = Cout * L_out

    col = jnp.arange(ncol)
    parity = jnp.where(col < n_even * Cout, 0, 1)
    rem = jnp.where(parity == 0, col, col - n_even * Cout)
    m = rem // Cout
    co = rem % Cout
    p = 2 * m + parity                                   # conv output position

    row = jnp.arange(L_in * Cin)
    pos_in = row // Cin
    ci = row % Cin

    t = pos_in[:, None] - S * p[None, :]                 # tap index, (nrow, ncol)
    valid = (t >= 0) & (t < k)
    vals = w[co[None, :], ci[:, None], jnp.clip(t, 0, k - 1)]
    W = jnp.where(valid, vals, 0.0).astype(jnp.float32)  # (L_in*Cin, Cout*L_out)
    bias_row = b[co][None, :].astype(jnp.float32)        # (1, ncol)
    return W, bias_row, L_out, n_even


def _pack_params(params, L, num_classes):
    # conv1 (Cin=1): W1 is (L, C1*L1)
    W1, B1r, L1, E1 = _conv_toeplitz_cm(params["w1"], params["b1"], L)
    P1 = _out_len(L1)
    # conv2: rows match the channel-minor pooled layout (m*C1 + ci), (C1*P1, C2*L2)
    W2, B2r, L2, E2 = _conv_toeplitz_cm(params["w2"], params["b2"], P1)
    P2 = _out_len(L2)

    # Collapse the affine head fc1 -> fc2 -> fc3 (no activations in between,
    # per the PyTorch module) into a single (C2*P2, num_classes) map + bias.
    f1w = params["fc1_w"].astype(jnp.float32)            # (H1, C2*P2)
    f2w = params["fc2_w"].astype(jnp.float32)            # (H2, H1)
    f3w = params["fc3_w"].astype(jnp.float32)            # (num_classes, H2)
    Wt = _hdot(_hdot(f1w.T, f2w.T), f3w.T)               # torch-flatten row order
    bt = _hdot(_hdot(params["fc1_b"].astype(jnp.float32), f2w.T)
               + params["fc2_b"].astype(jnp.float32), f3w.T) \
         + params["fc3_b"].astype(jnp.float32)

    # Row-permute from torch Flatten order (co*P2 + m) to kernel order (m*C2 + co).
    idx = jnp.arange(P2 * C2)
    perm = (idx % C2) * P2 + (idx // C2)
    Wk = Wt[perm]                                        # (C2*P2, num_classes)

    # Pad the head to 128 output lanes -> unmasked stores, dense writeback DMA.
    NOUT = _round_up(max(num_classes, 1), 128)
    WH = jnp.zeros((C2 * P2, NOUT), jnp.float32).at[:, :num_classes].set(Wk)
    BH = jnp.zeros((1, NOUT), jnp.float32).at[0, :num_classes].set(bt)

    packed = (W1, B1r, W2, B2r, WH, BH)
    geom = dict(L1=L1, E1=E1, P1=P1, L2=L2, E2=E2, P2=P2)
    return packed, geom


# --------------------------------------------------------------------------
# Fused kernel: whole forward for one batch tile.
# --------------------------------------------------------------------------
def _make_kernel(L1, E1, P1, L2, E2, P2):
    n_taps = K // 2          # 5 taps of each parity inside a pooling window

    def kernel(x_ref, w1_ref, b1_ref, w2_ref, b2_ref, wh_ref, bh_ref, o_ref):
        x = x_ref[...]                                               # (TB, L)

        # ---- Conv1d(1, 8) + bias + ReLU: one MXU matmul, lane-dense output.
        c1 = jnp.dot(x, w1_ref[...], preferred_element_type=jnp.float32)
        c1 = jnp.maximum(c1 + b1_ref[...], 0.0)                      # (TB, C1*L1)

        # ---- MaxPool1d(10, 2): 10 wide lane-dense slices (width C1*P1 = 464).
        wide1 = C1 * P1
        acc = None
        for base in (0, E1 * C1):                                    # even / odd block
            for i in range(n_taps):
                off = base + i * C1
                piece = c1[:, off:off + wide1]
                acc = piece if acc is None else jnp.maximum(acc, piece)
        p1 = acc                                                     # (TB, 464)  [m*C1 + c]

        # ---- Conv1d(8, 8) + bias + ReLU: ONE full-depth (K=464) MXU matmul.
        c2 = jnp.dot(p1, w2_ref[...], preferred_element_type=jnp.float32)
        c2 = jnp.maximum(c2 + b2_ref[...], 0.0)                      # (TB, C2*L2)

        # ---- MaxPool1d(10, 2) again: 10 slices of width C2*P2 = 64.
        wide2 = C2 * P2
        acc = None
        for base in (0, E2 * C2):
            for i in range(n_taps):
                off = base + i * C2
                piece = c2[:, off:off + wide2]
                acc = piece if acc is None else jnp.maximum(acc, piece)
        p2 = acc                                                     # (TB, 64)   [m*C2 + co]

        # ---- Flatten + fc1 + fc2 + fc3 collapsed to one affine map (128 lanes).
        y = jnp.dot(p2, wh_ref[...], preferred_element_type=jnp.float32) + bh_ref[...]
        o_ref[...] = y.astype(o_ref.dtype)

    return kernel


# --------------------------------------------------------------------------
# Wrapper: one pallas_call, gridded over the batch.
# --------------------------------------------------------------------------
def cnn_classifier_forward(x, params, num_classes=2, max_batch_tile=512):
    B, Cin, L = x.shape
    assert Cin == 1, "CNN_Classifier expects a single input channel"

    packed, g = _pack_params(params, L, num_classes)
    W1, B1, W2, B2, WH, BH = packed
    NOUT = WH.shape[1]

    x2 = x.reshape(B, L).astype(jnp.float32)
    TB = min(max_batch_tile, _round_up(B, 8))
    # v7x: keep >= 2 grid steps when the batch is big enough so the "parallel"
    # batch axis can be sharded across both TensorCores.
    if B >= 512 and pl.cdiv(B, TB) < 2:
        TB = 256
    Bp = _round_up(B, TB)
    if Bp != B:
        x2 = jnp.pad(x2, ((0, Bp - B), (0, 0)))

    kernel = _make_kernel(**g)

    def run(single_buffer_weights):
        def wspec(arr):
            if single_buffer_weights:
                return pl.BlockSpec(arr.shape, lambda i: (0, 0),
                                    pipeline_mode=pl.Buffered(1))
            return pl.BlockSpec(arr.shape, lambda i: (0, 0))

        return pl.pallas_call(
            kernel,
            out_shape=jax.ShapeDtypeStruct((Bp, NOUT), jnp.float32),
            grid=(Bp // TB,),
            in_specs=[pl.BlockSpec((TB, L), lambda i: (i, 0))]
                     + [wspec(w) for w in (W1, B1, W2, B2, WH, BH)],
            out_specs=pl.BlockSpec((TB, NOUT), lambda i: (i, 0)),
            compiler_params=pltpu.CompilerParams(
                dimension_semantics=("parallel",),
                vmem_limit_bytes=32 * 1024 * 1024),
        )(x2, W1, B1, W2, B2, WH, BH)

    try:
        out = run(True)
    except Exception:
        # Fallback if this JAX build rejects pipeline_mode=pl.Buffered(1)
        # (weights then just get the default double buffering).
        out = run(False)

    return out[:B, :num_classes]


# --------------------------------------------------------------------------
# Parameters (torch-native layouts) and a pure-JAX reference.
# --------------------------------------------------------------------------
def init_params(key, L=256, num_classes=2):
    L1 = _out_len(L); P1 = _out_len(L1); L2 = _out_len(P1); P2 = _out_len(L2)
    flat = C2 * P2
    ks = jax.random.split(key, 10)

    def unif(k, shape, fan_in):
        bound = 1.0 / (fan_in ** 0.5)
        return jax.random.uniform(k, shape, jnp.float32, -bound, bound)

    return dict(
        w1=unif(ks[0], (C1, 1, K), 1 * K),
        b1=unif(ks[1], (C1,), 1 * K),
        w2=unif(ks[2], (C2, C1, K), C1 * K),
        b2=unif(ks[3], (C2,), C1 * K),
        fc1_w=unif(ks[4], (H1, flat), flat),
        fc1_b=unif(ks[5], (H1,), flat),
        fc2_w=unif(ks[6], (H2, H1), H1),
        fc2_b=unif(ks[7], (H2,), H1),
        fc3_w=unif(ks[8], (num_classes, H2), H2),
        fc3_b=unif(ks[9], (num_classes,), H2),
    )


def reference_forward(x, p):
    def conv1d(x, w, b):
        Lout = _out_len(x.shape[-1])
        idx = jnp.arange(Lout)[:, None] * S + jnp.arange(K)[None, :]
        patches = x[:, :, idx]                                    # (B, Cin, Lout, K)
        return jnp.einsum("bclk,ock->bol", patches, w) + b[None, :, None]

    def maxpool(x):
        Lout = _out_len(x.shape[-1])
        idx = jnp.arange(Lout)[:, None] * S + jnp.arange(K)[None, :]
        return jnp.max(x[:, :, idx], axis=-1)

    h = jnp.maximum(conv1d(x, p["w1"], p["b1"]), 0.0)
    h = maxpool(h)
    h = jnp.maximum(conv1d(h, p["w2"], p["b2"]), 0.0)
    h = maxpool(h)
    h = h.reshape(h.shape[0], -1)                                 # torch Flatten order
    h = h @ p["fc1_w"].T + p["fc1_b"]
    h = h @ p["fc2_w"].T + p["fc2_b"]
    return h @ p["fc3_w"].T + p["fc3_b"]


# --------------------------------------------------------------------------
if __name__ == "__main__":
    key = jax.random.PRNGKey(0)
    k_x, k_p = jax.random.split(key)

    B, L, NUM_CLASSES = 2, 256, 2          # (B, 1, 256) -> flatten dim 64
    x = jax.random.normal(k_x, (B, 1, L), dtype=jnp.float32)
    params = init_params(k_p, L=L, num_classes=NUM_CLASSES)

    y = cnn_classifier_forward(x, params, num_classes=NUM_CLASSES)
    y = jax.block_until_ready(y)

    y_ref = reference_forward(x, params)
    assert y.shape == (B, NUM_CLASSES), y.shape
    assert jnp.allclose(y, y_ref, atol=1e-4, rtol=1e-4), "mismatch vs reference"

    print("KERNEL_OK")
</pallas_src>

<mosaic_0001>
module attributes {stable_mosaic.version = 11 : i64} {
  func.func @kernel(%arg0: i32, %arg1: memref<8x256xf32, #tpu.memory_space<vmem>>, %arg2: memref<256x992xf32, #tpu.memory_space<vmem>>, %arg3: memref<1x992xf32, #tpu.memory_space<vmem>>, %arg4: memref<464x200xf32, #tpu.memory_space<vmem>>, %arg5: memref<1x200xf32, #tpu.memory_space<vmem>>, %arg6: memref<64x128xf32, #tpu.memory_space<vmem>>, %arg7: memref<1x128xf32, #tpu.memory_space<vmem>>, %arg8: memref<8x128xf32, #tpu.memory_space<vmem>>) attributes {dimension_semantics = [#tpu.dimension_semantics<parallel>], iteration_bounds = array<i64: 1>, scalar_prefetch = 0 : i64, scratch_operands = 0 : i64, tpu.core_type = #tpu.core_type<tc>, window_params = [{transform_indices = @transform_0, window_bounds = array<i64: 8, 256>}, {pipeline_mode = #tpu.pipeline_mode<synchronous>, transform_indices = @transform_1, window_bounds = array<i64: 256, 992>}, {pipeline_mode = #tpu.pipeline_mode<synchronous>, transform_indices = @transform_2, window_bounds = array<i64: 1, 992>}, {pipeline_mode = #tpu.pipeline_mode<synchronous>, transform_indices = @transform_3, window_bounds = array<i64: 464, 200>}, {pipeline_mode = #tpu.pipeline_mode<synchronous>, transform_indices = @transform_4, window_bounds = array<i64: 1, 200>}, {pipeline_mode = #tpu.pipeline_mode<synchronous>, transform_indices = @transform_5, window_bounds = array<i64: 64, 128>}, {pipeline_mode = #tpu.pipeline_mode<synchronous>, transform_indices = @transform_6, window_bounds = array<i64: 1, 128>}, {transform_indices = @transform_7, window_bounds = array<i64: 8, 128>}]} {
    %c0 = arith.constant 0 : index
    %c0_0 = arith.constant 0 : index
    %0 = vector.load %arg1[%c0, %c0_0] : memref<8x256xf32, #tpu.memory_space<vmem>>, vector<8x256xf32>
    %c0_1 = arith.constant 0 : index
    %c0_2 = arith.constant 0 : index
    %1 = vector.load %arg2[%c0_1, %c0_2] : memref<256x992xf32, #tpu.memory_space<vmem>>, vector<256x992xf32>
    %cst = arith.constant dense<0.000000e+00> : vector<8x992xf32>
    %2 = tpu.matmul %0, %1, %cst {dimension_numbers = #tpu.dot_dimension_numbers<[1], [0], [0], [1], [0, 0, 1, 1], [], []>} : vector<8x256xf32>, vector<256x992xf32>, vector<8x992xf32> -> vector<8x992xf32>
    %c0_3 = arith.constant 0 : index
    %c0_4 = arith.constant 0 : index
    %3 = vector.load %arg3[%c0_3, %c0_4] : memref<1x992xf32, #tpu.memory_space<vmem>>, vector<1x992xf32>
    %4 = vector.broadcast %3 : vector<1x992xf32> to vector<8x992xf32>
    %5 = arith.addf %2, %4 : vector<8x992xf32>
    %cst_5 = arith.constant 0.000000e+00 : f32
    %6 = vector.broadcast %cst_5 : f32 to vector<8x992xf32>
    %7 = arith.maximumf %5, %6 : vector<8x992xf32>
    %8 = vector.extract_strided_slice %7 {offsets = [0, 0], sizes = [8, 464], strides = [1, 1]} : vector<8x992xf32> to vector<8x464xf32>
    %9 = vector.extract_strided_slice %7 {offsets = [0, 8], sizes = [8, 464], strides = [1, 1]} : vector<8x992xf32> to vector<8x464xf32>
    %10 = arith.maximumf %8, %9 : vector<8x464xf32>
    %11 = vector.extract_strided_slice %7 {offsets = [0, 16], sizes = [8, 464], strides = [1, 1]} : vector<8x992xf32> to vector<8x464xf32>
    %12 = arith.maximumf %10, %11 : vector<8x464xf32>
    %13 = vector.extract_strided_slice %7 {offsets = [0, 24], sizes = [8, 464], strides = [1, 1]} : vector<8x992xf32> to vector<8x464xf32>
    %14 = arith.maximumf %12, %13 : vector<8x464xf32>
    %15 = vector.extract_strided_slice %7 {offsets = [0, 32], sizes = [8, 464], strides = [1, 1]} : vector<8x992xf32> to vector<8x464xf32>
    %16 = arith.maximumf %14, %15 : vector<8x464xf32>
    %17 = vector.extract_strided_slice %7 {offsets = [0, 496], sizes = [8, 464], strides = [1, 1]} : vector<8x992xf32> to vector<8x464xf32>
    %18 = arith.maximumf %16, %17 : vector<8x464xf32>
    %19 = vector.extract_strided_slice %7 {offsets = [0, 504], sizes = [8, 464], strides = [1, 1]} : vector<8x992xf32> to vector<8x464xf32>
    %20 = arith.maximumf %18, %19 : vector<8x464xf32>
    %21 = vector.extract_strided_slice %7 {offsets = [0, 512], sizes = [8, 464], strides = [1, 1]} : vector<8x992xf32> to vector<8x464xf32>
    %22 = arith.maximumf %20, %21 : vector<8x464xf32>
    %23 = vector.extract_strided_slice %7 {offsets = [0, 520], sizes = [8, 464], strides = [1, 1]} : vector<8x992xf32> to vector<8x464xf32>
    %24 = arith.maximumf %22, %23 : vector<8x464xf32>
    %25 = vector.extract_strided_slice %7 {offsets = [0, 528], sizes = [8, 464], strides = [1, 1]} : vector<8x992xf32> to vector<8x464xf32>
    %26 = arith.maximumf %24, %25 : vector<8x464xf32>
    %c0_6 = arith.constant 0 : index
    %c0_7 = arith.constant 0 : index
    %27 = vector.load %arg4[%c0_6, %c0_7] : memref<464x200xf32, #tpu.memory_space<vmem>>, vector<464x200xf32>
    %cst_8 = arith.constant dense<0.000000e+00> : vector<8x200xf32>
    %28 = tpu.matmul %26, %27, %cst_8 {dimension_numbers = #tpu.dot_dimension_numbers<[1], [0], [0], [1], [0, 0, 1, 1], [], []>} : vector<8x464xf32>, vector<464x200xf32>, vector<8x200xf32> -> vector<8x200xf32>
    %c0_9 = arith.constant 0 : index
    %c0_10 = arith.constant 0 : index
    %29 = vector.load %arg5[%c0_9, %c0_10] : memref<1x200xf32, #tpu.memory_space<vmem>>, vector<1x200xf32>
    %30 = vector.broadcast %29 : vector<1x200xf32> to vector<8x200xf32>
    %31 = arith.addf %28, %30 : vector<8x200xf32>
    %cst_11 = arith.constant 0.000000e+00 : f32
    %32 = vector.broadcast %cst_11 : f32 to vector<8x200xf32>
    %33 = arith.maximumf %31, %32 : vector<8x200xf32>
    %34 = vector.extract_strided_slice %33 {offsets = [0, 0], sizes = [8, 64], strides = [1, 1]} : vector<8x200xf32> to vector<8x64xf32>
    %35 = vector.extract_strided_slice %33 {offsets = [0, 8], sizes = [8, 64], strides = [1, 1]} : vector<8x200xf32> to vector<8x64xf32>
    %36 = arith.maximumf %34, %35 : vector<8x64xf32>
    %37 = vector.extract_strided_slice %33 {offsets = [0, 16], sizes = [8, 64], strides = [1, 1]} : vector<8x200xf32> to vector<8x64xf32>
    %38 = arith.maximumf %36, %37 : vector<8x64xf32>
    %39 = vector.extract_strided_slice %33 {offsets = [0, 24], sizes = [8, 64], strides = [1, 1]} : vector<8x200xf32> to vector<8x64xf32>
    %40 = arith.maximumf %38, %39 : vector<8x64xf32>
    %41 = vector.extract_strided_slice %33 {offsets = [0, 32], sizes = [8, 64], strides = [1, 1]} : vector<8x200xf32> to vector<8x64xf32>
    %42 = arith.maximumf %40, %41 : vector<8x64xf32>
    %43 = vector.extract_strided_slice %33 {offsets = [0, 104], sizes = [8, 64], strides = [1, 1]} : vector<8x200xf32> to vector<8x64xf32>
    %44 = arith.maximumf %42, %43 : vector<8x64xf32>
    %45 = vector.extract_strided_slice %33 {offsets = [0, 112], sizes = [8, 64], strides = [1, 1]} : vector<8x200xf32> to vector<8x64xf32>
    %46 = arith.maximumf %44, %45 : vector<8x64xf32>
    %47 = vector.extract_strided_slice %33 {offsets = [0, 120], sizes = [8, 64], strides = [1, 1]} : vector<8x200xf32> to vector<8x64xf32>
    %48 = arith.maximumf %46, %47 : vector<8x64xf32>
    %49 = vector.extract_strided_slice %33 {offsets = [0, 128], sizes = [8, 64], strides = [1, 1]} : vector<8x200xf32> to vector<8x64xf32>
    %50 = arith.maximumf %48, %49 : vector<8x64xf32>
    %51 = vector.extract_strided_slice %33 {offsets = [0, 136], sizes = [8, 64], strides = [1, 1]} : vector<8x200xf32> to vector<8x64xf32>
    %52 = arith.maximumf %50, %51 : vector<8x64xf32>
    %c0_12 = arith.constant 0 : index
    %c0_13 = arith.constant 0 : index
    %53 = vector.load %arg6[%c0_12, %c0_13] : memref<64x128xf32, #tpu.memory_space<vmem>>, vector<64x128xf32>
    %cst_14 = arith.constant dense<0.000000e+00> : vector<8x128xf32>
    %54 = tpu.matmul %52, %53, %cst_14 {dimension_numbers = #tpu.dot_dimension_numbers<[1], [0], [0], [1], [0, 0, 1, 1], [], []>} : vector<8x64xf32>, vector<64x128xf32>, vector<8x128xf32> -> vector<8x128xf32>
    %c0_15 = arith.constant 0 : index
    %c0_16 = arith.constant 0 : index
    %55 = vector.load %arg7[%c0_15, %c0_16] : memref<1x128xf32, #tpu.memory_space<vmem>>, vector<1x128xf32>
    %56 = vector.broadcast %55 : vector<1x128xf32> to vector<8x128xf32>
    %57 = arith.addf %54, %56 : vector<8x128xf32>
    %c0_17 = arith.constant 0 : index
    %c0_18 = arith.constant 0 : index
    %58 = vector.load %arg8[%c0_17, %c0_18] : memref<8x128xf32, #tpu.memory_space<vmem>>, vector<8x128xf32>
    tpu.vector_store %arg8[%c0_17, %c0_18], %57 {strides = array<i32>} : memref<8x128xf32, #tpu.memory_space<vmem>>, vector<8x128xf32>,
    return
  }
  func.func @transform_0(%arg0: i32) -> (i32, i32) {
    %c0_i32 = arith.constant 0 : i32
    %c0_i32_0 = arith.constant 0 : i32
    return %arg0, %c0_i32 : i32, i32
  }
  func.func @transform_1(%arg0: i32) -> (i32, i32) {
    %c0_i32 = arith.constant 0 : i32
    %c0_i32_0 = arith.constant 0 : i32
    %c0_i32_1 = arith.constant 0 : i32
    return %c0_i32, %c0_i32_0 : i32, i32
  }
  func.func @transform_2(%arg0: i32) -> (i32, i32) {
    %c0_i32 = arith.constant 0 : i32
    %c0_i32_0 = arith.constant 0 : i32
    %c0_i32_1 = arith.constant 0 : i32
    return %c0_i32, %c0_i32_0 : i32, i32
  }
  func.func @transform_3(%arg0: i32) -> (i32, i32) {
    %c0_i32 = arith.constant 0 : i32
    %c0_i32_0 = arith.constant 0 : i32
    %c0_i32_1 = arith.constant 0 : i32
    return %c0_i32, %c0_i32_0 : i32, i32
  }
  func.func @transform_4(%arg0: i32) -> (i32, i32) {
    %c0_i32 = arith.constant 0 : i32
    %c0_i32_0 = arith.constant 0 : i32
    %c0_i32_1 = arith.constant 0 : i32
    return %c0_i32, %c0_i32_0 : i32, i32
  }
  func.func @transform_5(%arg0: i32) -> (i32, i32) {
    %c0_i32 = arith.constant 0 : i32
    %c0_i32_0 = arith.constant 0 : i32
    %c0_i32_1 = arith.constant 0 : i32
    return %c0_i32, %c0_i32_0 : i32, i32
  }
  func.func @transform_6(%arg0: i32) -> (i32, i32) {
    %c0_i32 = arith.constant 0 : i32
    %c0_i32_0 = arith.constant 0 : i32
    %c0_i32_1 = arith.constant 0 : i32
    return %c0_i32, %c0_i32_0 : i32, i32
  }
  func.func @transform_7(%arg0: i32) -> (i32, i32) {
    %c0_i32 = arith.constant 0 : i32
    %c0_i32_0 = arith.constant 0 : i32
    return %arg0, %c0_i32 : i32, i32
  }
}

module attributes {stable_mosaic.version = 11 : i64} {
  func.func @kernel(%arg0: i32, %arg1: memref<8x256xf32, #tpu.memory_space<vmem>>, %arg2: memref<256x992xf32, #tpu.memory_space<vmem>>, %arg3: memref<1x992xf32, #tpu.memory_space<vmem>>, %arg4: memref<464x200xf32, #tpu.memory_space<vmem>>, %arg5: memref<1x200xf32, #tpu.memory_space<vmem>>, %arg6: memref<64x128xf32, #tpu.memory_space<vmem>>, %arg7: memref<1x128xf32, #tpu.memory_space<vmem>>, %arg8: memref<8x128xf32, #tpu.memory_space<vmem>>) attributes {dimension_semantics = [#tpu.dimension_semantics<parallel>], iteration_bounds = array<i64: 1>, scalar_prefetch = 0 : i64, scratch_operands = 0 : i64, tpu.core_type = #tpu.core_type<tc>, window_params = [{transform_indices = @transform_0, window_bounds = array<i64: 8, 256>}, {pipeline_mode = #tpu.pipeline_mode<synchronous>, transform_indices = @transform_1, window_bounds = array<i64: 256, 992>}, {pipeline_mode = #tpu.pipeline_mode<synchronous>, transform_indices = @transform_2, window_bounds = array<i64: 1, 992>}, {pipeline_mode = #tpu.pipeline_mode<synchronous>, transform_indices = @transform_3, window_bounds = array<i64: 464, 200>}, {pipeline_mode = #tpu.pipeline_mode<synchronous>, transform_indices = @transform_4, window_bounds = array<i64: 1, 200>}, {pipeline_mode = #tpu.pipeline_mode<synchronous>, transform_indices = @transform_5, window_bounds = array<i64: 64, 128>}, {pipeline_mode = #tpu.pipeline_mode<synchronous>, transform_indices = @transform_6, window_bounds = array<i64: 1, 128>}, {transform_indices = @transform_7, window_bounds = array<i64: 8, 128>}]} {
    %c0 = arith.constant 0 : index
    %c0_0 = arith.constant 0 : index
    %0 = vector.load %arg1[%c0, %c0_0] : memref<8x256xf32, #tpu.memory_space<vmem>>, vector<8x256xf32>
    %c0_1 = arith.constant 0 : index
    %c0_2 = arith.constant 0 : index
    %1 = vector.load %arg2[%c0_1, %c0_2] : memref<256x992xf32, #tpu.memory_space<vmem>>, vector<256x992xf32>
    %cst = arith.constant dense<0.000000e+00> : vector<8x992xf32>
    %2 = tpu.matmul %0, %1, %cst {dimension_numbers = #tpu.dot_dimension_numbers<[1], [0], [0], [1], [0, 0, 1, 1], [], []>} : vector<8x256xf32>, vector<256x992xf32>, vector<8x992xf32> -> vector<8x992xf32>
    %c0_3 = arith.constant 0 : index
    %c0_4 = arith.constant 0 : index
    %3 = vector.load %arg3[%c0_3, %c0_4] : memref<1x992xf32, #tpu.memory_space<vmem>>, vector<1x992xf32>
    %4 = vector.broadcast %3 : vector<1x992xf32> to vector<8x992xf32>
    %5 = arith.addf %2, %4 : vector<8x992xf32>
    %cst_5 = arith.constant 0.000000e+00 : f32
    %6 = vector.broadcast %cst_5 : f32 to vector<8x992xf32>
    %7 = arith.maximumf %5, %6 : vector<8x992xf32>
    %8 = vector.extract_strided_slice %7 {offsets = [0, 0], sizes = [8, 464], strides = [1, 1]} : vector<8x992xf32> to vector<8x464xf32>
    %9 = vector.extract_strided_slice %7 {offsets = [0, 8], sizes = [8, 464], strides = [1, 1]} : vector<8x992xf32> to vector<8x464xf32>
    %10 = arith.maximumf %8, %9 : vector<8x464xf32>
    %11 = vector.extract_strided_slice %7 {offsets = [0, 16], sizes = [8, 464], strides = [1, 1]} : vector<8x992xf32> to vector<8x464xf32>
    %12 = arith.maximumf %10, %11 : vector<8x464xf32>
    %13 = vector.extract_strided_slice %7 {offsets = [0, 24], sizes = [8, 464], strides = [1, 1]} : vector<8x992xf32> to vector<8x464xf32>
    %14 = arith.maximumf %12, %13 : vector<8x464xf32>
    %15 = vector.extract_strided_slice %7 {offsets = [0, 32], sizes = [8, 464], strides = [1, 1]} : vector<8x992xf32> to vector<8x464xf32>
    %16 = arith.maximumf %14, %15 : vector<8x464xf32>
    %17 = vector.extract_strided_slice %7 {offsets = [0, 496], sizes = [8, 464], strides = [1, 1]} : vector<8x992xf32> to vector<8x464xf32>
    %18 = arith.maximumf %16, %17 : vector<8x464xf32>
    %19 = vector.extract_strided_slice %7 {offsets = [0, 504], sizes = [8, 464], strides = [1, 1]} : vector<8x992xf32> to vector<8x464xf32>
    %20 = arith.maximumf %18, %19 : vector<8x464xf32>
    %21 = vector.extract_strided_slice %7 {offsets = [0, 512], sizes = [8, 464], strides = [1, 1]} : vector<8x992xf32> to vector<8x464xf32>
    %22 = arith.maximumf %20, %21 : vector<8x464xf32>
    %23 = vector.extract_strided_slice %7 {offsets = [0, 520], sizes = [8, 464], strides = [1, 1]} : vector<8x992xf32> to vector<8x464xf32>
    %24 = arith.maximumf %22, %23 : vector<8x464xf32>
    %25 = vector.extract_strided_slice %7 {offsets = [0, 528], sizes = [8, 464], strides = [1, 1]} : vector<8x992xf32> to vector<8x464xf32>
    %26 = arith.maximumf %24, %25 : vector<8x464xf32>
    %c0_6 = arith.constant 0 : index
    %c0_7 = arith.constant 0 : index
    %27 = vector.load %arg4[%c0_6, %c0_7] : memref<464x200xf32, #tpu.memory_space<vmem>>, vector<464x200xf32>
    %cst_8 = arith.constant dense<0.000000e+00> : vector<8x200xf32>
    %28 = tpu.matmul %26, %27, %cst_8 {dimension_numbers = #tpu.dot_dimension_numbers<[1], [0], [0], [1], [0, 0, 1, 1], [], []>} : vector<8x464xf32>, vector<464x200xf32>, vector<8x200xf32> -> vector<8x200xf32>
    %c0_9 = arith.constant 0 : index
    %c0_10 = arith.constant 0 : index
    %29 = vector.load %arg5[%c0_9, %c0_10] : memref<1x200xf32, #tpu.memory_space<vmem>>, vector<1x200xf32>
    %30 = vector.broadcast %29 : vector<1x200xf32> to vector<8x200xf32>
    %31 = arith.addf %28, %30 : vector<8x200xf32>
    %cst_11 = arith.constant 0.000000e+00 : f32
    %32 = vector.broadcast %cst_11 : f32 to vector<8x200xf32>
    %33 = arith.maximumf %31, %32 : vector<8x200xf32>
    %34 = vector.extract_strided_slice %33 {offsets = [0, 0], sizes = [8, 64], strides = [1, 1]} : vector<8x200xf32> to vector<8x64xf32>
    %35 = vector.extract_strided_slice %33 {offsets = [0, 8], sizes = [8, 64], strides = [1, 1]} : vector<8x200xf32> to vector<8x64xf32>
    %36 = arith.maximumf %34, %35 : vector<8x64xf32>
    %37 = vector.extract_strided_slice %33 {offsets = [0, 16], sizes = [8, 64], strides = [1, 1]} : vector<8x200xf32> to vector<8x64xf32>
    %38 = arith.maximumf %36, %37 : vector<8x64xf32>
    %39 = vector.extract_strided_slice %33 {offsets = [0, 24], sizes = [8, 64], strides = [1, 1]} : vector<8x200xf32> to vector<8x64xf32>
    %40 = arith.maximumf %38, %39 : vector<8x64xf32>
    %41 = vector.extract_strided_slice %33 {offsets = [0, 32], sizes = [8, 64], strides = [1, 1]} : vector<8x200xf32> to vector<8x64xf32>
    %42 = arith.maximumf %40, %41 : vector<8x64xf32>
    %43 = vector.extract_strided_slice %33 {offsets = [0, 104], sizes = [8, 64], strides = [1, 1]} : vector<8x200xf32> to vector<8x64xf32>
    %44 = arith.maximumf %42, %43 : vector<8x64xf32>
    %45 = vector.extract_strided_slice %33 {offsets = [0, 112], sizes = [8, 64], strides = [1, 1]} : vector<8x200xf32> to vector<8x64xf32>
    %46 = arith.maximumf %44, %45 : vector<8x64xf32>
    %47 = vector.extract_strided_slice %33 {offsets = [0, 120], sizes = [8, 64], strides = [1, 1]} : vector<8x200xf32> to vector<8x64xf32>
    %48 = arith.maximumf %46, %47 : vector<8x64xf32>
    %49 = vector.extract_strided_slice %33 {offsets = [0, 128], sizes = [8, 64], strides = [1, 1]} : vector<8x200xf32> to vector<8x64xf32>
    %50 = arith.maximumf %48, %49 : vector<8x64xf32>
    %51 = vector.extract_strided_slice %33 {offsets = [0, 136], sizes = [8, 64], strides = [1, 1]} : vector<8x200xf32> to vector<8x64xf32>
    %52 = arith.maximumf %50, %51 : vector<8x64xf32>
    %c0_12 = arith.constant 0 : index
    %c0_13 = arith.constant 0 : index
    %53 = vector.load %arg6[%c0_12, %c0_13] : memref<64x128xf32, #tpu.memory_space<vmem>>, vector<64x128xf32>
    %cst_14 = arith.constant dense<0.000000e+00> : vector<8x128xf32>
    %54 = tpu.matmul %52, %53, %cst_14 {dimension_numbers = #tpu.dot_dimension_numbers<[1], [0], [0], [1], [0, 0, 1, 1], [], []>} : vector<8x64xf32>, vector<64x128xf32>, vector<8x128xf32> -> vector<8x128xf32>
    %c0_15 = arith.constant 0 : index
    %c0_16 = arith.constant 0 : index
    %55 = vector.load %arg7[%c0_15, %c0_16] : memref<1x128xf32, #tpu.memory_space<vmem>>, vector<1x128xf32>
    %56 = vector.broadcast %55 : vector<1x128xf32> to vector<8x128xf32>
    %57 = arith.addf %54, %56 : vector<8x128xf32>
    %c0_17 = arith.constant 0 : index
    %c0_18 = arith.constant 0 : index
    %58 = vector.load %arg8[%c0_17, %c0_18] : memref<8x128xf32, #tpu.memory_space<vmem>>, vector<8x128xf32>
    tpu.vector_store %arg8[%c0_17, %c0_18], %57 {strides = array<i32>} : memref<8x128xf32, #tpu.memory_space<vmem>>, vector<8x128xf32>,
    return
  }
  func.func @transform_0(%arg0: i32) -> (i32, i32) {
    %c0_i32 = arith.constant 0 : i32
    %c0_i32_0 = arith.constant 0 : i32
    return %arg0, %c0_i32 : i32, i32
  }
  func.func @transform_1(%arg0: i32) -> (i32, i32) {
    %c0_i32 = arith.constant 0 : i32
    %c0_i32_0 = arith.constant 0 : i32
    %c0_i32_1 = arith.constant 0 : i32
    return %c0_i32, %c0_i32_0 : i32, i32
  }
  func.func @transform_2(%arg0: i32) -> (i32, i32) {
    %c0_i32 = arith.constant 0 : i32
    %c0_i32_0 = arith.constant 0 : i32
    %c0_i32_1 = arith.constant 0 : i32
    return %c0_i32, %c0_i32_0 : i32, i32
  }
  func.func @transform_3(%arg0: i32) -> (i32, i32) {
    %c0_i32 = arith.constant 0 : i32
    %c0_i32_0 = arith.constant 0 : i32
    %c0_i32_1 = arith.constant 0 : i32
    return %c0_i32, %c0_i32_0 : i32, i32
  }
  func.func @transform_4(%arg0: i32) -> (i32, i32) {
    %c0_i32 = arith.constant 0 : i32
    %c0_i32_0 = arith.constant 0 : i32
    %c0_i32_1 = arith.constant 0 : i32
    return %c0_i32, %c0_i32_0 : i32, i32
  }
  func.func @transform_5(%arg0: i32) -> (i32, i32) {
    %c0_i32 = arith.constant 0 : i32
    %c0_i32_0 = arith.constant 0 : i32
    %c0_i32_1 = arith.constant 0 : i32
    return %c0_i32, %c0_i32_0 : i32, i32
  }
  func.func @transform_6(%arg0: i32) -> (i32, i32) {
    %c0_i32 = arith.constant 0 : i32
    %c0_i32_0 = arith.constant 0 : i32
    %c0_i32_1 = arith.constant 0 : i32
    return %c0_i32, %c0_i32_0 : i32, i32
  }
  func.func @transform_7(%arg0: i32) -> (i32, i32) {
    %c0_i32 = arith.constant 0 : i32
    %c0_i32_0 = arith.constant 0 : i32
    return %arg0, %c0_i32 : i32, i32
  }
}

</mosaic_0001>

<llo_original>
// kernel: tpu_custom_call.1
$region0: #{tpu_custom_call.1}
  #allocation0 [shape = 'u32[]', space=smem, size = 0x4, offset = 0x4, fixed_abs, tag = 'smem constant byte address 0x4 - core index']
  #allocation1 [shape = 'u32[72,128]{1,0:T(1,128)}', space=vmem, size = 0x9000, scoped, tag = 'internal scratch']
  %s0 = inlined_call_operand.vmem [shape: f32[8,256], index: 0, kind: input, shape index: {}]
  %s1 = inlined_call_operand.vmem [shape: f32[256,992], index: 1, kind: input, shape index: {}]
  %s2 = inlined_call_operand.vmem [shape: f32[1,992], index: 2, kind: input, shape index: {}]
  %s3 = inlined_call_operand.vmem [shape: f32[464,200], index: 3, kind: input, shape index: {}]
  %s4 = inlined_call_operand.vmem [shape: f32[1,200], index: 4, kind: input, shape index: {}]
  %s5 = inlined_call_operand.vmem [shape: f32[64,128], index: 5, kind: input, shape index: {}]
  %s6 = inlined_call_operand.vmem [shape: f32[1,128], index: 6, kind: input, shape index: {}]
  %s7 = inlined_call_operand.hbm [shape: f32[8,128], index: 7, kind: output, shape index: {}]
  %s8 = sld [smem:[#allocation0]]
  $region38: #{tpu_custom_call.1} parent=0
    _
  %s10 = ssub.s32 1, %s8
  %s11 = scalar_select 0, %s10, %s8
  $region1: #{tpu_custom_call.1} parent=0
    #allocation2 [shape = 'u8[4096]{0}', space=vmem, size = 0x1000, scoped, tag = 'output window, operand 0, single buffered']
    #allocation3 [shape = 's32[1]{0}', space=sflag, size = 0x4, scoped, tag = 'scoped memory for tpu_custom_call.1']
    %12 = vsyncpa [#allocation3], 0
    // Predicated region
    $region2: #{tpu_custom_call.1} parent=1 // pred_check
      _
    $region3: #{tpu_custom_call.1} parent=1 // pred_check_branch
      %14 = sbr.rel (0) target = $region5
    $region4: #{tpu_custom_call.1} parent=1 // pred_region
      _
    $region5: #{tpu_custom_call.1} parent=1 // pred_fallthru
      _
    // Predicated region
    $region6: #{tpu_custom_call.1} parent=1 // pred_check
      _
    $region7: #{tpu_custom_call.1} parent=1 // pred_check_branch
      %16 = sbr.rel (0) target = $region9
    $region8: #{tpu_custom_call.1} parent=1 // pred_region
      _
    $region9: #{tpu_custom_call.1} parent=1 // pred_fallthru
      _
    // Predicated region
    $region10: #{tpu_custom_call.1} parent=1 // pred_check
      _
    $region11: #{tpu_custom_call.1} parent=1 // pred_check_branch
      %18 = sbr.rel (0) target = $region13
    $region12: #{tpu_custom_call.1} parent=1 // pred_region
      _
    $region13: #{tpu_custom_call.1} parent=1 // pred_fallthru
      _
    // Predicated region
    $region14: #{tpu_custom_call.1} parent=1 // pred_check
      _
    $region15: #{tpu_custom_call.1} parent=1 // pred_check_branch
      %20 = sbr.rel (0) target = $region17
    $region16: #{tpu_custom_call.1} parent=1 // pred_region
      _
    $region17: #{tpu_custom_call.1} parent=1 // pred_fallthru
      _
    // Predicated region
    $region18: #{tpu_custom_call.1} parent=1 // pred_check
      _
    $region19: #{tpu_custom_call.1} parent=1 // pred_check_branch
      %22 = sbr.rel (0) target = $region21
    $region20: #{tpu_custom_call.1} parent=1 // pred_region
      _
    $region21: #{tpu_custom_call.1} parent=1 // pred_fallthru
      _
    // Predicated region
    $region22: #{tpu_custom_call.1} parent=1 // pred_check
      _
    $region23: #{tpu_custom_call.1} parent=1 // pred_check_branch
      %24 = sbr.rel (0) target = $region25
    $region24: #{tpu_custom_call.1} parent=1 // pred_region
      _
    $region25: #{tpu_custom_call.1} parent=1 // pred_fallthru
      _
    // Predicated region
    $region26: #{tpu_custom_call.1} parent=1 // pred_check
      _
    $region27: #{tpu_custom_call.1} parent=1 // pred_check_branch
      %26 = sbr.rel (0) target = $region29
    $region28: #{tpu_custom_call.1} parent=1 // pred_region
      _
    $region29: #{tpu_custom_call.1} parent=1 // pred_fallthru
      _
    %v27 = vld [vmem:[%s0] sm:$0xff]
    %v28 = vld [vmem:[%s0 + $0x8] sm:$0xff]
    %v29 = vld [vmem:[%s1] sm:$0xff]
    %v30 = vld [vmem:[%s1 + $0x8] sm:$0xff]
    %v31 = vld [vmem:[%s1 + $0x10] sm:$0xff]
    %v32 = vld [vmem:[%s1 + $0x18] sm:$0xff]
    %v33 = vld [vmem:[%s1 + $0x20] sm:$0xff]
    %v34 = vld [vmem:[%s1 + $0x28] sm:$0xff]
    %v35 = vld [vmem:[%s1 + $0x30] sm:$0xff]
    %v36 = vld [vmem:[%s1 + $0x38] sm:$0xff]
    %v37 = vld [vmem:[%s1 + $0x40] sm:$0xff]
    %v38 = vld [vmem:[%s1 + $0x48] sm:$0xff]
    %v39 = vld [vmem:[%s1 + $0x50] sm:$0xff]
    %v40 = vld [vmem:[%s1 + $0x58] sm:$0xff]
    %v41 = vld [vmem:[%s1 + $0x60] sm:$0xff]
    %v42 = vld [vmem:[%s1 + $0x68] sm:$0xff]
    %v43 = vld [vmem:[%s1 + $0x70] sm:$0xff]
    %v44 = vld [vmem:[%s1 + $0x78] sm:$0xff]
    %v45 = vld [vmem:[%s1 + $0x80] sm:$0xff]
    %v46 = vld [vmem:[%s1 + $0x88] sm:$0xff]
    %v47 = vld [vmem:[%s1 + $0x90] sm:$0xff]
    %v48 = vld [vmem:[%s1 + $0x98] sm:$0xff]
    %v49 = vld [vmem:[%s1 + $0xa0] sm:$0xff]
    %v50 = vld [vmem:[%s1 + $0xa8] sm:$0xff]
    %v51 = vld [vmem:[%s1 + $0xb0] sm:$0xff]
    %v52 = vld [vmem:[%s1 + $0xb8] sm:$0xff]
    %v53 = vld [vmem:[%s1 + $0xc0] sm:$0xff]
    %v54 = vld [vmem:[%s1 + $0xc8] sm:$0xff]
    %v55 = vld [vmem:[%s1 + $0xd0] sm:$0xff]
    %v56 = vld [vmem:[%s1 + $0xd8] sm:$0xff]
    %v57 = vld [vmem:[%s1 + $0xe0] sm:$0xff]
    %v58 = vld [vmem:[%s1 + $0xe8] sm:$0xff]
    %v59 = vld [vmem:[%s1 + $0xf0] sm:$0xff]
    %v60 = vld [vmem:[%s1 + $0xf8] sm:$0xff]
    %v61 = vld [vmem:[%s1 + $0x100] sm:$0xff]
    %v62 = vld [vmem:[%s1 + $0x108] sm:$0xff]
    %v63 = vld [vmem:[%s1 + $0x110] sm:$0xff]
    %v64 = vld [vmem:[%s1 + $0x118] sm:$0xff]
    %v65 = vld [vmem:[%s1 + $0x120] sm:$0xff]
    %v66 = vld [vmem:[%s1 + $0x128] sm:$0xff]
    %v67 = vld [vmem:[%s1 + $0x130] sm:$0xff]
    %v68 = vld [vmem:[%s1 + $0x138] sm:$0xff]
    %v69 = vld [vmem:[%s1 + $0x140] sm:$0xff]
    %v70 = vld [vmem:[%s1 + $0x148] sm:$0xff]
    %v71 = vld [vmem:[%s1 + $0x150] sm:$0xff]
    %v72 = vld [vmem:[%s1 + $0x158] sm:$0xff]
    %v73 = vld [vmem:[%s1 + $0x160] sm:$0xff]
    %v74 = vld [vmem:[%s1 + $0x168] sm:$0xff]
    %v75 = vld [vmem:[%s1 + $0x170] sm:$0xff]
    %v76 = vld [vmem:[%s1 + $0x178] sm:$0xff]
    %v77 = vld [vmem:[%s1 + $0x180] sm:$0xff]
    %v78 = vld [vmem:[%s1 + $0x188] sm:$0xff]
    %v79 = vld [vmem:[%s1 + $0x190] sm:$0xff]
    %v80 = vld [vmem:[%s1 + $0x198] sm:$0xff]
    %v81 = vld [vmem:[%s1 + $0x1a0] sm:$0xff]
    %v82 = vld [vmem:[%s1 + $0x1a8] sm:$0xff]
    %v83 = vld [vmem:[%s1 + $0x1b0] sm:$0xff]
    %v84 = vld [vmem:[%s1 + $0x1b8] sm:$0xff]
    %v85 = vld [vmem:[%s1 + $0x1c0] sm:$0xff]
    %v86 = vld [vmem:[%s1 + $0x1c8] sm:$0xff]
    %v87 = vld [vmem:[%s1 + $0x1d0] sm:$0xff]
    %v88 = vld [vmem:[%s1 + $0x1d8] sm:$0xff]
    %v89 = vld [vmem:[%s1 + $0x1e0] sm:$0xff]
    %v90 = vld [vmem:[%s1 + $0x1e8] sm:$0xff]
    %v91 = vld [vmem:[%s1 + $0x1f0] sm:$0xff]
    %v92 = vld [vmem:[%s1 + $0x1f8] sm:$0xff]
    %v93 = vld [vmem:[%s1 + $0x200] sm:$0xff]
    %v94 = vld [vmem:[%s1 + $0x208] sm:$0xff]
    %v95 = vld [vmem:[%s1 + $0x210] sm:$0xff]
    %v96 = vld [vmem:[%s1 + $0x218] sm:$0xff]
    %v97 = vld [vmem:[%s1 + $0x220] sm:$0xff]
    %v98 = vld [vmem:[%s1 + $0x228] sm:$0xff]
    %v99 = vld [vmem:[%s1 + $0x230] sm:$0xff]
    %v100 = vld [vmem:[%s1 + $0x238] sm:$0xff]
    %v101 = vld [vmem:[%s1 + $0x240] sm:$0xff]
    %v102 = vld [vmem:[%s1 + $0x248] sm:$0xff]
    %v103 = vld [vmem:[%s1 + $0x250] sm:$0xff]
    %v104 = vld [vmem:[%s1 + $0x258] sm:$0xff]
    %v105 = vld [vmem:[%s1 + $0x260] sm:$0xff]
    %v106 = vld [vmem:[%s1 + $0x268] sm:$0xff]
    %v107 = vld [vmem:[%s1 + $0x270] sm:$0xff]
    %v108 = vld [vmem:[%s1 + $0x278] sm:$0xff]
    %v109 = vld [vmem:[%s1 + $0x280] sm:$0xff]
    %v110 = vld [vmem:[%s1 + $0x288] sm:$0xff]
    %v111 = vld [vmem:[%s1 + $0x290] sm:$0xff]
    %v112 = vld [vmem:[%s1 + $0x298] sm:$0xff]
    %v113 = vld [vmem:[%s1 + $0x2a0] sm:$0xff]
    %v114 = vld [vmem:[%s1 + $0x2a8] sm:$0xff]
    %v115 = vld [vmem:[%s1 + $0x2b0] sm:$0xff]
    %v116 = vld [vmem:[%s1 + $0x2b8] sm:$0xff]
    %v117 = vld [vmem:[%s1 + $0x2c0] sm:$0xff]
    %v118 = vld [vmem:[%s1 + $0x2c8] sm:$0xff]
    %v119 = vld [vmem:[%s1 + $0x2d0] sm:$0xff]
    %v120 = vld [vmem:[%s1 + $0x2d8] sm:$0xff]
    %v121 = vld [vmem:[%s1 + $0x2e0] sm:$0xff]
    %v122 = vld [vmem:[%s1 + $0x2e8] sm:$0xff]
    %v123 = vld [vmem:[%s1 + $0x2f0] sm:$0xff]
    %v124 = vld [vmem:[%s1 + $0x2f8] sm:$0xff]
    %v125 = vld [vmem:[%s1 + $0x300] sm:$0xff]
    %v126 = vld [vmem:[%s1 + $0x308] sm:$0xff]
    %v127 = vld [vmem:[%s1 + $0x310] sm:$0xff]
    %v128 = vld [vmem:[%s1 + $0x318] sm:$0xff]
    %v129 = vld [vmem:[%s1 + $0x320] sm:$0xff]
    %v130 = vld [vmem:[%s1 + $0x328] sm:$0xff]
    %v131 = vld [vmem:[%s1 + $0x330] sm:$0xff]
    %v132 = vld [vmem:[%s1 + $0x338] sm:$0xff]
    %v133 = vld [vmem:[%s1 + $0x340] sm:$0xff]
    %v134 = vld [vmem:[%s1 + $0x348] sm:$0xff]
    %v135 = vld [vmem:[%s1 + $0x350] sm:$0xff]
    %v136 = vld [vmem:[%s1 + $0x358] sm:$0xff]
    %v137 = vld [vmem:[%s1 + $0x360] sm:$0xff]
    %v138 = vld [vmem:[%s1 + $0x368] sm:$0xff]
    %v139 = vld [vmem:[%s1 + $0x370] sm:$0xff]
    %v140 = vld [vmem:[%s1 + $0x378] sm:$0xff]
    %v141 = vld [vmem:[%s1 + $0x380] sm:$0xff]
    %v142 = vld [vmem:[%s1 + $0x388] sm:$0xff]
    %v143 = vld [vmem:[%s1 + $0x390] sm:$0xff]
    %v144 = vld [vmem:[%s1 + $0x398] sm:$0xff]
    %v145 = vld [vmem:[%s1 + $0x3a0] sm:$0xff]
    %v146 = vld [vmem:[%s1 + $0x3a8] sm:$0xff]
    %v147 = vld [vmem:[%s1 + $0x3b0] sm:$0xff]
    %v148 = vld [vmem:[%s1 + $0x3b8] sm:$0xff]
    %v149 = vld [vmem:[%s1 + $0x3c0] sm:$0xff]
    %v150 = vld [vmem:[%s1 + $0x3c8] sm:$0xff]
    %v151 = vld [vmem:[%s1 + $0x3d0] sm:$0xff]
    %v152 = vld [vmem:[%s1 + $0x3d8] sm:$0xff]
    %v153 = vld [vmem:[%s1 + $0x3e0] sm:$0xff]
    %v154 = vld [vmem:[%s1 + $0x3e8] sm:$0xff]
    %v155 = vld [vmem:[%s1 + $0x3f0] sm:$0xff]
    %v156 = vld [vmem:[%s1 + $0x3f8] sm:$0xff]
    %v157 = vld [vmem:[%s1 + $0x400] sm:$0xff]
    %v158 = vld [vmem:[%s1 + $0x408] sm:$0xff]
    %v159 = vld [vmem:[%s1 + $0x410] sm:$0xff]
    %v160 = vld [vmem:[%s1 + $0x418] sm:$0xff]
    %v161 = vld [vmem:[%s1 + $0x420] sm:$0xff]
    %v162 = vld [vmem:[%s1 + $0x428] sm:$0xff]
    %v163 = vld [vmem:[%s1 + $0x430] sm:$0xff]
    %v164 = vld [vmem:[%s1 + $0x438] sm:$0xff]
    %v165 = vld [vmem:[%s1 + $0x440] sm:$0xff]
    %v166 = vld [vmem:[%s1 + $0x448] sm:$0xff]
    %v167 = vld [vmem:[%s1 + $0x450] sm:$0xff]
    %v168 = vld [vmem:[%s1 + $0x458] sm:$0xff]
    %v169 = vld [vmem:[%s1 + $0x460] sm:$0xff]
    %v170 = vld [vmem:[%s1 + $0x468] sm:$0xff]
    %v171 = vld [vmem:[%s1 + $0x470] sm:$0xff]
    %v172 = vld [vmem:[%s1 + $0x478] sm:$0xff]
    %v173 = vld [vmem:[%s1 + $0x480] sm:$0xff]
    %v174 = vld [vmem:[%s1 + $0x488] sm:$0xff]
    %v175 = vld [vmem:[%s1 + $0x490] sm:$0xff]
    %v176 = vld [vmem:[%s1 + $0x498] sm:$0xff]
    %v177 = vld [vmem:[%s1 + $0x4a0] sm:$0xff]
    %v178 = vld [vmem:[%s1 + $0x4a8] sm:$0xff]
    %v179 = vld [vmem:[%s1 + $0x4b0] sm:$0xff]
    %v180 = vld [vmem:[%s1 + $0x4b8] sm:$0xff]
    %v181 = vld [vmem:[%s1 + $0x4c0] sm:$0xff]
    %v182 = vld [vmem:[%s1 + $0x4c8] sm:$0xff]
    %v183 = vld [vmem:[%s1 + $0x4d0] sm:$0xff]
    %v184 = vld [vmem:[%s1 + $0x4d8] sm:$0xff]
    %v185 = vld [vmem:[%s1 + $0x4e0] sm:$0xff]
    %v186 = vld [vmem:[%s1 + $0x4e8] sm:$0xff]
    %v187 = vld [vmem:[%s1 + $0x4f0] sm:$0xff]
    %v188 = vld [vmem:[%s1 + $0x4f8] sm:$0xff]
    %v189 = vld [vmem:[%s1 + $0x500] sm:$0xff]
    %v190 = vld [vmem:[%s1 + $0x508] sm:$0xff]
    %v191 = vld [vmem:[%s1 + $0x510] sm:$0xff]
    %v192 = vld [vmem:[%s1 + $0x518] sm:$0xff]
    %v193 = vld [vmem:[%s1 + $0x520] sm:$0xff]
    %v194 = vld [vmem:[%s1 + $0x528] sm:$0xff]
    %v195 = vld [vmem:[%s1 + $0x530] sm:$0xff]
    %v196 = vld [vmem:[%s1 + $0x538] sm:$0xff]
    %v197 = vld [vmem:[%s1 + $0x540] sm:$0xff]
    %v198 = vld [vmem:[%s1 + $0x548] sm:$0xff]
    %v199 = vld [vmem:[%s1 + $0x550] sm:$0xff]
    %v200 = vld [vmem:[%s1 + $0x558] sm:$0xff]
    %v201 = vld [vmem:[%s1 + $0x560] sm:$0xff]
    %v202 = vld [vmem:[%s1 + $0x568] sm:$0xff]
    %v203 = vld [vmem:[%s1 + $0x570] sm:$0xff]
    %v204 = vld [vmem:[%s1 + $0x578] sm:$0xff]
    %v205 = vld [vmem:[%s1 + $0x580] sm:$0xff]
    %v206 = vld [vmem:[%s1 + $0x588] sm:$0xff]
    %v207 = vld [vmem:[%s1 + $0x590] sm:$0xff]
    %v208 = vld [vmem:[%s1 + $0x598] sm:$0xff]
    %v209 = vld [vmem:[%s1 + $0x5a0] sm:$0xff]
    %v210 = vld [vmem:[%s1 + $0x5a8] sm:$0xff]
    %v211 = vld [vmem:[%s1 + $0x5b0] sm:$0xff]
    %v212 = vld [vmem:[%s1 + $0x5b8] sm:$0xff]
    %v213 = vld [vmem:[%s1 + $0x5c0] sm:$0xff]
    %v214 = vld [vmem:[%s1 + $0x5c8] sm:$0xff]
    %v215 = vld [vmem:[%s1 + $0x5d0] sm:$0xff]
    %v216 = vld [vmem:[%s1 + $0x5d8] sm:$0xff]
    %v217 = vld [vmem:[%s1 + $0x5e0] sm:$0xff]
    %v218 = vld [vmem:[%s1 + $0x5e8] sm:$0xff]
    %v219 = vld [vmem:[%s1 + $0x5f0] sm:$0xff]
    %v220 = vld [vmem:[%s1 + $0x5f8] sm:$0xff]
    %v221 = vld [vmem:[%s1 + $0x600] sm:$0xff]
    %v222 = vld [vmem:[%s1 + $0x608] sm:$0xff]
    %v223 = vld [vmem:[%s1 + $0x610] sm:$0xff]
    %v224 = vld [vmem:[%s1 + $0x618] sm:$0xff]
    %v225 = vld [vmem:[%s1 + $0x620] sm:$0xff]
    %v226 = vld [vmem:[%s1 + $0x628] sm:$0xff]
    %v227 = vld [vmem:[%s1 + $0x630] sm:$0xff]
    %v228 = vld [vmem:[%s1 + $0x638] sm:$0xff]
    %v229 = vld [vmem:[%s1 + $0x640] sm:$0xff]
    %v230 = vld [vmem:[%s1 + $0x648] sm:$0xff]
    %v231 = vld [vmem:[%s1 + $0x650] sm:$0xff]
    %v232 = vld [vmem:[%s1 + $0x658] sm:$0xff]
    %v233 = vld [vmem:[%s1 + $0x660] sm:$0xff]
    %v234 = vld [vmem:[%s1 + $0x668] sm:$0xff]
    %v235 = vld [vmem:[%s1 + $0x670] sm:$0xff]
    %v236 = vld [vmem:[%s1 + $0x678] sm:$0xff]
    %v237 = vld [vmem:[%s1 + $0x680] sm:$0xff]
    %v238 = vld [vmem:[%s1 + $0x688] sm:$0xff]
    %v239 = vld [vmem:[%s1 + $0x690] sm:$0xff]
    %v240 = vld [vmem:[%s1 + $0x698] sm:$0xff]
    %v241 = vld [vmem:[%s1 + $0x6a0] sm:$0xff]
    %v242 = vld [vmem:[%s1 + $0x6a8] sm:$0xff]
    %v243 = vld [vmem:[%s1 + $0x6b0] sm:$0xff]
    %v244 = vld [vmem:[%s1 + $0x6b8] sm:$0xff]
    %v245 = vld [vmem:[%s1 + $0x6c0] sm:$0xff]
    %v246 = vld [vmem:[%s1 + $0x6c8] sm:$0xff]
    %v247 = vld [vmem:[%s1 + $0x6d0] sm:$0xff]
    %v248 = vld [vmem:[%s1 + $0x6d8] sm:$0xff]
    %v249 = vld [vmem:[%s1 + $0x6e0] sm:$0xff]
    %v250 = vld [vmem:[%s1 + $0x6e8] sm:$0xff]
    %v251 = vld [vmem:[%s1 + $0x6f0] sm:$0xff]
    %v252 = vld [vmem:[%s1 + $0x6f8] sm:$0xff]
    %v253 = vld [vmem:[%s1 + $0x700] sm:$0xff]
    %v254 = vld [vmem:[%s1 + $0x708] sm:$0xff]
    %v255 = vld [vmem:[%s1 + $0x710] sm:$0xff]
    %v256 = vld [vmem:[%s1 + $0x718] sm:$0xff]
    %v257 = vld [vmem:[%s1 + $0x720] sm:$0xff]
    %v258 = vld [vmem:[%s1 + $0x728] sm:$0xff]
    %v259 = vld [vmem:[%s1 + $0x730] sm:$0xff]
    %v260 = vld [vmem:[%s1 + $0x738] sm:$0xff]
    %v261 = vld [vmem:[%s1 + $0x740] sm:$0xff]
    %v262 = vld [vmem:[%s1 + $0x748] sm:$0xff]
    %v263 = vld [vmem:[%s1 + $0x750] sm:$0xff]
    %v264 = vld [vmem:[%s1 + $0x758] sm:$0xff]
    %v265 = vld [vmem:[%s1 + $0x760] sm:$0xff]
    %v266 = vld [vmem:[%s1 + $0x768] sm:$0xff]
    %v267 = vld [vmem:[%s1 + $0x770] sm:$0xff]
    %v268 = vld [vmem:[%s1 + $0x778] sm:$0xff]
    %v269 = vld [vmem:[%s1 + $0x780] sm:$0xff]
    %v270 = vld [vmem:[%s1 + $0x788] sm:$0xff]
    %v271 = vld [vmem:[%s1 + $0x790] sm:$0xff]
    %v272 = vld [vmem:[%s1 + $0x798] sm:$0xff]
    %v273 = vld [vmem:[%s1 + $0x7a0] sm:$0xff]
    %v274 = vld [vmem:[%s1 + $0x7a8] sm:$0xff]
    %v275 = vld [vmem:[%s1 + $0x7b0] sm:$0xff]
    %v276 = vld [vmem:[%s1 + $0x7b8] sm:$0xff]
    %v277 = vld [vmem:[%s1 + $0x7c0] sm:$0xff]
    %v278 = vld [vmem:[%s1 + $0x7c8] sm:$0xff]
    %v279 = vld [vmem:[%s1 + $0x7d0] sm:$0xff]
    %v280 = vld [vmem:[%s1 + $0x7d8] sm:$0xff]
    %v281 = vld [vmem:[%s1 + $0x7e0] sm:$0xff]
    %v282 = vld [vmem:[%s1 + $0x7e8] sm:$0xff]
    %v283 = vld [vmem:[%s1 + $0x7f0] sm:$0xff]
    %v284 = vld [vmem:[%s1 + $0x7f8] sm:$0xff]
    %v285 = vld [vmem:[%s2] sm:$0xff]
    %v287 = vperm.slane %v285, 0
    %v288 = vperm.slane %v285, 1
    %v289 = vperm.slane %v285, 2
    %v290 = vperm.slane %v285, 3
    %v291 = vperm.slane %v285, 4
    %v292 = vperm.slane %v285, 5
    %v293 = vperm.slane %v285, 6
    %v294 = vperm.slane %v285, 7
    %303 = vmatpush.msra.mxu0 %v149
    %304 = vmatpush.msra.mxu0 %v141
    %305 = vmatpush.msra.mxu0 %v133
    %306 = vmatpush.msra.mxu0 %v125
    %307 = vmatpush.msra.mxu0 %v117
    %308 = vmatpush.msra.mxu0 %v109
    %309 = vmatpush.msra.mxu0 %v101
    %310 = vmatpush.msra.mxu0 %v93
    %311 = vmatpush.msra.mxu0 %v85
    %312 = vmatpush.msra.mxu0 %v77
    %313 = vmatpush.msra.mxu0 %v69
    %314 = vmatpush.msra.mxu0 %v61
    %315 = vmatpush.msra.mxu0 %v53
    %316 = vmatpush.msra.mxu0 %v45
    %317 = vmatpush.msra.mxu0 %v37
    %318 = vmatpush.msra.mxu0 %v29
    %319 = vmatmul.f32.gmra.mxu0 %v27
    %v320 = vpop.f32.mrf.mxu0
    %v321 = vadd.f32 %v287, %v320
    %322 = vdwg.mxu0
    %323 = vmatpush.msra.mxu0 %v277
    %324 = vmatpush.msra.mxu0 %v269
    %325 = vmatpush.msra.mxu0 %v261
    %326 = vmatpush.msra.mxu0 %v253
    %327 = vmatpush.msra.mxu0 %v245
    %328 = vmatpush.msra.mxu0 %v237
    %329 = vmatpush.msra.mxu0 %v229
    %330 = vmatpush.msra.mxu0 %v221
    %331 = vmatpush.msra.mxu0 %v213
    %332 = vmatpush.msra.mxu0 %v205
    %333 = vmatpush.msra.mxu0 %v197
    %334 = vmatpush.msra.mxu0 %v189
    %335 = vmatpush.msra.mxu0 %v181
    %336 = vmatpush.msra.mxu0 %v173
    %337 = vmatpush.msra.mxu0 %v165
    %338 = vmatpush.msra.mxu0 %v157
    %339 = vmatmul.f32.gmra.mxu0 %v28
    %v340 = vpop.f32.mrf.mxu0
    %v341 = vadd.f32 %v321, %v340
    %342 = vdwg.mxu0
    %343 = vmatpush.msra.mxu0 %v150
    %344 = vmatpush.msra.mxu0 %v142
    %345 = vmatpush.msra.mxu0 %v134
    %346 = vmatpush.msra.mxu0 %v126
    %347 = vmatpush.msra.mxu0 %v118
    %348 = vmatpush.msra.mxu0 %v110
    %349 = vmatpush.msra.mxu0 %v102
    %350 = vmatpush.msra.mxu0 %v94
    %351 = vmatpush.msra.mxu0 %v86
    %352 = vmatpush.msra.mxu0 %v78
    %353 = vmatpush.msra.mxu0 %v70
    %354 = vmatpush.msra.mxu0 %v62
    %355 = vmatpush.msra.mxu0 %v54
    %356 = vmatpush.msra.mxu0 %v46
    %357 = vmatpush.msra.mxu0 %v38
    %358 = vmatpush.msra.mxu0 %v30
    %359 = vmatmul.f32.gmra.mxu0 %v27
    %v360 = vpop.f32.mrf.mxu0
    %v361 = vadd.f32 %v288, %v360
    %362 = vdwg.mxu0
    %363 = vmatpush.msra.mxu0 %v278
    %364 = vmatpush.msra.mxu0 %v270
    %365 = vmatpush.msra.mxu0 %v262
    %366 = vmatpush.msra.mxu0 %v254
    %367 = vmatpush.msra.mxu0 %v246
    %368 = vmatpush.msra.mxu0 %v238
    %369 = vmatpush.msra.mxu0 %v230
    %370 = vmatpush.msra.mxu0 %v222
    %371 = vmatpush.msra.mxu0 %v214
    %372 = vmatpush.msra.mxu0 %v206
    %373 = vmatpush.msra.mxu0 %v198
    %374 = vmatpush.msra.mxu0 %v190
    %375 = vmatpush.msra.mxu0 %v182
    %376 = vmatpush.msra.mxu0 %v174
    %377 = vmatpush.msra.mxu0 %v166
    %378 = vmatpush.msra.mxu0 %v158
    %379 = vmatmul.f32.gmra.mxu0 %v28
    %v380 = vpop.f32.mrf.mxu0
    %v381 = vadd.f32 %v361, %v380
    %382 = vdwg.mxu0
    %383 = vmatpush.msra.mxu0 %v151
    %384 = vmatpush.msra.mxu0 %v143
    %385 = vmatpush.msra.mxu0 %v135
    %386 = vmatpush.msra.mxu0 %v127
    %387 = vmatpush.msra.mxu0 %v119
    %388 = vmatpush.msra.mxu0 %v111
    %389 = vmatpush.msra.mxu0 %v103
    %390 = vmatpush.msra.mxu0 %v95
    %391 = vmatpush.msra.mxu0 %v87
    %392 = vmatpush.msra.mxu0 %v79
    %393 = vmatpush.msra.mxu0 %v71
    %394 = vmatpush.msra.mxu0 %v63
    %395 = vmatpush.msra.mxu0 %v55
    %396 = vmatpush.msra.mxu0 %v47
    %397 = vmatpush.msra.mxu0 %v39
    %398 = vmatpush.msra.mxu0 %v31
    %399 = vmatmul.f32.gmra.mxu0 %v27
    %v400 = vpop.f32.mrf.mxu0
    %v401 = vadd.f32 %v289, %v400
    %402 = vdwg.mxu0
    %403 = vmatpush.msra.mxu0 %v279
    %404 = vmatpush.msra.mxu0 %v271
    %405 = vmatpush.msra.mxu0 %v263
    %406 = vmatpush.msra.mxu0 %v255
    %407 = vmatpush.msra.mxu0 %v247
    %408 = vmatpush.msra.mxu0 %v239
    %409 = vmatpush.msra.mxu0 %v231
    %410 = vmatpush.msra.mxu0 %v223
    %411 = vmatpush.msra.mxu0 %v215
    %412 = vmatpush.msra.mxu0 %v207
    %413 = vmatpush.msra.mxu0 %v199
    %414 = vmatpush.msra.mxu0 %v191
    %415 = vmatpush.msra.mxu0 %v183
    %416 = vmatpush.msra.mxu0 %v175
    %417 = vmatpush.msra.mxu0 %v167
    %418 = vmatpush.msra.mxu0 %v159
    %419 = vmatmul.f32.gmra.mxu0 %v28
    %v420 = vpop.f32.mrf.mxu0
    %v421 = vadd.f32 %v401, %v420
    %422 = vdwg.mxu0
    %423 = vmatpush.msra.mxu0 %v152
    %424 = vmatpush.msra.mxu0 %v144
    %425 = vmatpush.msra.mxu0 %v136
    %426 = vmatpush.msra.mxu0 %v128
    %427 = vmatpush.msra.mxu0 %v120
    %428 = vmatpush.msra.mxu0 %v112
    %429 = vmatpush.msra.mxu0 %v104
    %430 = vmatpush.msra.mxu0 %v96
    %431 = vmatpush.msra.mxu0 %v88
    %432 = vmatpush.msra.mxu0 %v80
    %433 = vmatpush.msra.mxu0 %v72
    %434 = vmatpush.msra.mxu0 %v64
    %435 = vmatpush.msra.mxu0 %v56
    %436 = vmatpush.msra.mxu0 %v48
    %437 = vmatpush.msra.mxu0 %v40
    %438 = vmatpush.msra.mxu0 %v32
    %439 = vmatmul.f32.gmra.mxu0 %v27
    %v440 = vpop.f32.mrf.mxu0
    %v441 = vadd.f32 %v290, %v440
    %442 = vdwg.mxu0
    %443 = vmatpush.msra.mxu0 %v280
    %444 = vmatpush.msra.mxu0 %v272
    %445 = vmatpush.msra.mxu0 %v264
    %446 = vmatpush.msra.mxu0 %v256
    %447 = vmatpush.msra.mxu0 %v248
    %448 = vmatpush.msra.mxu0 %v240
    %449 = vmatpush.msra.mxu0 %v232
    %450 = vmatpush.msra.mxu0 %v224
    %451 = vmatpush.msra.mxu0 %v216
    %452 = vmatpush.msra.mxu0 %v208
    %453 = vmatpush.msra.mxu0 %v200
    %454 = vmatpush.msra.mxu0 %v192
    %455 = vmatpush.msra.mxu0 %v184
    %456 = vmatpush.msra.mxu0 %v176
    %457 = vmatpush.msra.mxu0 %v168
    %458 = vmatpush.msra.mxu0 %v160
    %459 = vmatmul.f32.gmra.mxu0 %v28
    %v460 = vpop.f32.mrf.mxu0
    %v461 = vadd.f32 %v441, %v460
    %462 = vdwg.mxu0
    %463 = vmatpush.msra.mxu0 %v153
    %464 = vmatpush.msra.mxu0 %v145
    %465 = vmatpush.msra.mxu0 %v137
    %466 = vmatpush.msra.mxu0 %v129
    %467 = vmatpush.msra.mxu0 %v121
    %468 = vmatpush.msra.mxu0 %v113
    %469 = vmatpush.msra.mxu0 %v105
    %470 = vmatpush.msra.mxu0 %v97
    %471 = vmatpush.msra.mxu0 %v89
    %472 = vmatpush.msra.mxu0 %v81
    %473 = vmatpush.msra.mxu0 %v73
    %474 = vmatpush.msra.mxu0 %v65
    %475 = vmatpush.msra.mxu0 %v57
    %476 = vmatpush.msra.mxu0 %v49
    %477 = vmatpush.msra.mxu0 %v41
    %478 = vmatpush.msra.mxu0 %v33
    %479 = vmatmul.f32.gmra.mxu0 %v27
    %v480 = vpop.f32.mrf.mxu0
    %v481 = vadd.f32 %v291, %v480
    %482 = vdwg.mxu0
    %483 = vmatpush.msra.mxu0 %v281
    %484 = vmatpush.msra.mxu0 %v273
    %485 = vmatpush.msra.mxu0 %v265
    %486 = vmatpush.msra.mxu0 %v257
    %487 = vmatpush.msra.mxu0 %v249
    %488 = vmatpush.msra.mxu0 %v241
    %489 = vmatpush.msra.mxu0 %v233
    %490 = vmatpush.msra.mxu0 %v225
    %491 = vmatpush.msra.mxu0 %v217
    %492 = vmatpush.msra.mxu0 %v209
    %493 = vmatpush.msra.mxu0 %v201
    %494 = vmatpush.msra.mxu0 %v193
    %495 = vmatpush.msra.mxu0 %v185
    %496 = vmatpush.msra.mxu0 %v177
    %497 = vmatpush.msra.mxu0 %v169
    %498 = vmatpush.msra.mxu0 %v161
    %499 = vmatmul.f32.gmra.mxu0 %v28
    %v500 = vpop.f32.mrf.mxu0
    %v501 = vadd.f32 %v481, %v500
    %502 = vdwg.mxu0
    %503 = vmatpush.msra.mxu0 %v154
    %504 = vmatpush.msra.mxu0 %v146
    %505 = vmatpush.msra.mxu0 %v138
    %506 = vmatpush.msra.mxu0 %v130
    %507 = vmatpush.msra.mxu0 %v122
    %508 = vmatpush.msra.mxu0 %v114
    %509 = vmatpush.msra.mxu0 %v106
    %510 = vmatpush.msra.mxu0 %v98
    %511 = vmatpush.msra.mxu0 %v90
    %512 = vmatpush.msra.mxu0 %v82
    %513 = vmatpush.msra.mxu0 %v74
    %514 = vmatpush.msra.mxu0 %v66
    %515 = vmatpush.msra.mxu0 %v58
    %516 = vmatpush.msra.mxu0 %v50
    %517 = vmatpush.msra.mxu0 %v42
    %518 = vmatpush.msra.mxu0 %v34
    %519 = vmatmul.f32.gmra.mxu0 %v27
    %v520 = vpop.f32.mrf.mxu0
    %v521 = vadd.f32 %v292, %v520
    %522 = vdwg.mxu0
    %523 = vmatpush.msra.mxu0 %v282
    %524 = vmatpush.msra.mxu0 %v274
    %525 = vmatpush.msra.mxu0 %v266
    %526 = vmatpush.msra.mxu0 %v258
    %527 = vmatpush.msra.mxu0 %v250
    %528 = vmatpush.msra.mxu0 %v242
    %529 = vmatpush.msra.mxu0 %v234
    %530 = vmatpush.msra.mxu0 %v226
    %531 = vmatpush.msra.mxu0 %v218
    %532 = vmatpush.msra.mxu0 %v210
    %533 = vmatpush.msra.mxu0 %v202
    %534 = vmatpush.msra.mxu0 %v194
    %535 = vmatpush.msra.mxu0 %v186
    %536 = vmatpush.msra.mxu0 %v178
    %537 = vmatpush.msra.mxu0 %v170
    %538 = vmatpush.msra.mxu0 %v162
    %539 = vmatmul.f32.gmra.mxu0 %v28
    %v540 = vpop.f32.mrf.mxu0
    %v541 = vadd.f32 %v521, %v540
    %542 = vdwg.mxu0
    %543 = vmatpush.msra.mxu0 %v155
    %544 = vmatpush.msra.mxu0 %v147
    %545 = vmatpush.msra.mxu0 %v139
    %546 = vmatpush.msra.mxu0 %v131
    %547 = vmatpush.msra.mxu0 %v123
    %548 = vmatpush.msra.mxu0 %v115
    %549 = vmatpush.msra.mxu0 %v107
    %550 = vmatpush.msra.mxu0 %v99
    %551 = vmatpush.msra.mxu0 %v91
    %552 = vmatpush.msra.mxu0 %v83
    %553 = vmatpush.msra.mxu0 %v75
    %554 = vmatpush.msra.mxu0 %v67
    %555 = vmatpush.msra.mxu0 %v59
    %556 = vmatpush.msra.mxu0 %v51
    %557 = vmatpush.msra.mxu0 %v43
    %558 = vmatpush.msra.mxu0 %v35
    %559 = vmatmul.f32.gmra.mxu0 %v27
    %v560 = vpop.f32.mrf.mxu0
    %v561 = vadd.f32 %v293, %v560
    %562 = vdwg.mxu0
    %563 = vmatpush.msra.mxu0 %v283
    %564 = vmatpush.msra.mxu0 %v275
    %565 = vmatpush.msra.mxu0 %v267
    %566 = vmatpush.msra.mxu0 %v259
    %567 = vmatpush.msra.mxu0 %v251
    %568 = vmatpush.msra.mxu0 %v243
    %569 = vmatpush.msra.mxu0 %v235
    %570 = vmatpush.msra.mxu0 %v227
    %571 = vmatpush.msra.mxu0 %v219
    %572 = vmatpush.msra.mxu0 %v211
    %573 = vmatpush.msra.mxu0 %v203
    %574 = vmatpush.msra.mxu0 %v195
    %575 = vmatpush.msra.mxu0 %v187
    %576 = vmatpush.msra.mxu0 %v179
    %577 = vmatpush.msra.mxu0 %v171
    %578 = vmatpush.msra.mxu0 %v163
    %579 = vmatmul.f32.gmra.mxu0 %v28
    %v580 = vpop.f32.mrf.mxu0
    %v581 = vadd.f32 %v561, %v580
    %582 = vdwg.mxu0
    %583 = vmatpush.msra.mxu0 %v156
    %584 = vmatpush.msra.mxu0 %v148
    %585 = vmatpush.msra.mxu0 %v140
    %586 = vmatpush.msra.mxu0 %v132
    %587 = vmatpush.msra.mxu0 %v124
    %588 = vmatpush.msra.mxu0 %v116
    %589 = vmatpush.msra.mxu0 %v108
    %590 = vmatpush.msra.mxu0 %v100
    %591 = vmatpush.msra.mxu0 %v92
    %592 = vmatpush.msra.mxu0 %v84
    %593 = vmatpush.msra.mxu0 %v76
    %594 = vmatpush.msra.mxu0 %v68
    %595 = vmatpush.msra.mxu0 %v60
    %596 = vmatpush.msra.mxu0 %v52
    %597 = vmatpush.msra.mxu0 %v44
    %598 = vmatpush.msra.mxu0 %v36
    %599 = vmatmul.f32.gmra.mxu0 %v27
    %v600 = vpop.f32.mrf.mxu0
    %v601 = vadd.f32 %v294, %v600
    %602 = vdwg.mxu0
    %603 = vmatpush.msra.mxu0 %v284
    %604 = vmatpush.msra.mxu0 %v276
    %605 = vmatpush.msra.mxu0 %v268
    %606 = vmatpush.msra.mxu0 %v260
    %607 = vmatpush.msra.mxu0 %v252
    %608 = vmatpush.msra.mxu0 %v244
    %609 = vmatpush.msra.mxu0 %v236
    %610 = vmatpush.msra.mxu0 %v228
    %611 = vmatpush.msra.mxu0 %v220
    %612 = vmatpush.msra.mxu0 %v212
    %613 = vmatpush.msra.mxu0 %v204
    %614 = vmatpush.msra.mxu0 %v196
    %615 = vmatpush.msra.mxu0 %v188
    %616 = vmatpush.msra.mxu0 %v180
    %617 = vmatpush.msra.mxu0 %v172
    %618 = vmatpush.msra.mxu0 %v164
    %619 = vmatmul.f32.gmra.mxu0 %v28
    %v620 = vpop.f32.mrf.mxu0
    %v621 = vadd.f32 %v601, %v620
    %622 = vdwg.mxu0
    %v623 = vmax.f32 %v341, 0.0
    %v624 = vmax.f32 %v381, 0.0
    %v625 = vmax.f32 %v421, 0.0
    %v626 = vmax.f32 %v461, 0.0
    %v627 = vmax.f32 %v501, 0.0
    %v628 = vmax.f32 %v541, 0.0
    %v629 = vmax.f32 %v581, 0.0
    %v630 = vmax.f32 %v621, 0.0
    %635 = vrot.lane.b32.xlu0 %v623, 120
    %v636 = vpop.permute.xlu0 %635
    %637 = vrot.lane.b32.xlu0 %v624, 120
    %v638 = vpop.permute.xlu0 %637
    %639 = vrot.lane.b32.xlu0 %v625, 120
    %v640 = vpop.permute.xlu0 %639
    %641 = vrot.lane.b32.xlu0 %v626, 120
    %v642 = vpop.permute.xlu0 %641
    %vm643 = vcmask 982016
    %v644 = vsel %vm643, %v636, %v638
    %v645 = vsel %vm643, %v638, %v640
    %v646 = vsel %vm643, %v640, %v642
    %v651 = vmax.f32 %v623, %v644
    %v652 = vmax.f32 %v624, %v645
    %v653 = vmax.f32 %v625, %v646
    %v654 = vmax.f32 %v626, %v642
    %655 = vrot.lane.b32.xlu0 %v623, 112
    %v656 = vpop.permute.xlu0 %655
    %657 = vrot.lane.b32.xlu0 %v624, 112
    %v658 = vpop.permute.xlu0 %657
    %659 = vrot.lane.b32.xlu0 %v625, 112
    %v660 = vpop.permute.xlu0 %659
    %661 = vrot.lane.b32.xlu0 %v626, 112
    %v662 = vpop.permute.xlu0 %661
    %vm663 = vcmask 916480
    %v664 = vsel %vm663, %v656, %v658
    %v665 = vsel %vm663, %v658, %v660
    %v666 = vsel %vm663, %v660, %v662
    %v671 = vmax.f32 %v651, %v664
    %v672 = vmax.f32 %v652, %v665
    %v673 = vmax.f32 %v653, %v666
    %v674 = vmax.f32 %v654, %v662
    %675 = vrot.lane.b32.xlu0 %v623, 104
    %v676 = vpop.permute.xlu0 %675
    %677 = vrot.lane.b32.xlu0 %v624, 104
    %v678 = vpop.permute.xlu0 %677
    %679 = vrot.lane.b32.xlu0 %v625, 104
    %v680 = vpop.permute.xlu0 %679
    %681 = vrot.lane.b32.xlu0 %v626, 104
    %v682 = vpop.permute.xlu0 %681
    %vm683 = vcmask 850944
    %v684 = vsel %vm683, %v676, %v678
    %v685 = vsel %vm683, %v678, %v680
    %v686 = vsel %vm683, %v680, %v682
    %v691 = vmax.f32 %v671, %v684
    %v692 = vmax.f32 %v672, %v685
    %v693 = vmax.f32 %v673, %v686
    %v694 = vmax.f32 %v674, %v682
    %695 = vrot.lane.b32.xlu0 %v623, 96
    %v696 = vpop.permute.xlu0 %695
    %697 = vrot.lane.b32.xlu0 %v624, 96
    %v698 = vpop.permute.xlu0 %697
    %699 = vrot.lane.b32.xlu0 %v625, 96
    %v700 = vpop.permute.xlu0 %699
    %701 = vrot.lane.b32.xlu0 %v626, 96
    %v702 = vpop.permute.xlu0 %701
    %vm703 = vcmask 785408
    %v704 = vsel %vm703, %v696, %v698
    %v705 = vsel %vm703, %v698, %v700
    %v706 = vsel %vm703, %v700, %v702
    %v711 = vmax.f32 %v691, %v704
    %v712 = vmax.f32 %v692, %v705
    %v713 = vmax.f32 %v693, %v706
    %v714 = vmax.f32 %v694, %v702
    %719 = vrot.lane.b32.xlu0 %v626, 16
    %v720 = vpop.permute.xlu0 %719
    %721 = vrot.lane.b32.xlu0 %v627, 16
    %v722 = vpop.permute.xlu0 %721
    %723 = vrot.lane.b32.xlu0 %v628, 16
    %v724 = vpop.permute.xlu0 %723
    %725 = vrot.lane.b32.xlu0 %v629, 16
    %v726 = vpop.permute.xlu0 %725
    %727 = vrot.lane.b32.xlu0 %v630, 16
    %v728 = vpop.permute.xlu0 %727
    %vm729 = vcmask 130048
    %v730 = vsel %vm729, %v720, %v722
    %v731 = vsel %vm729, %v722, %v724
    %v732 = vsel %vm729, %v724, %v726
    %v733 = vsel %vm729, %v726, %v728
    %v738 = vmax.f32 %v711, %v730
    %v739 = vmax.f32 %v712, %v731
    %v740 = vmax.f32 %v713, %v732
    %v741 = vmax.f32 %v714, %v733
    %742 = vrot.lane.b32.xlu0 %v626, 8
    %v743 = vpop.permute.xlu0 %742
    %744 = vrot.lane.b32.xlu0 %v627, 8
    %v745 = vpop.permute.xlu0 %744
    %746 = vrot.lane.b32.xlu0 %v628, 8
    %v747 = vpop.permute.xlu0 %746
    %748 = vrot.lane.b32.xlu0 %v629, 8
    %v749 = vpop.permute.xlu0 %748
    %750 = vrot.lane.b32.xlu0 %v630, 8
    %v751 = vpop.permute.xlu0 %750
    %vm752 = vcmask 64512
    %v753 = vsel %vm752, %v743, %v745
    %v754 = vsel %vm752, %v745, %v747
    %v755 = vsel %vm752, %v747, %v749
    %v756 = vsel %vm752, %v749, %v751
    %v761 = vmax.f32 %v738, %v753
    %v762 = vmax.f32 %v739, %v754
    %v763 = vmax.f32 %v740, %v755
    %v764 = vmax.f32 %v741, %v756
    %v765 = vmax.f32 %v761, %v627
    %v766 = vmax.f32 %v762, %v628
    %v767 = vmax.f32 %v763, %v629
    %v768 = vmax.f32 %v764, %v630
    %769 = vrot.lane.b32.xlu0 %v627, 120
    %v770 = vpop.permute.xlu0 %769
    %771 = vrot.lane.b32.xlu0 %v628, 120
    %v772 = vpop.permute.xlu0 %771
    %773 = vrot.lane.b32.xlu0 %v629, 120
    %v774 = vpop.permute.xlu0 %773
    %775 = vrot.lane.b32.xlu0 %v630, 120
    %v776 = vpop.permute.xlu0 %775
    %v777 = vsel %vm643, %v770, %v772
    %v778 = vsel %vm643, %v772, %v774
    %v779 = vsel %vm643, %v774, %v776
    %v784 = vmax.f32 %v765, %v777
    %v785 = vmax.f32 %v766, %v778
    %v786 = vmax.f32 %v767, %v779
    %v787 = vmax.f32 %v768, %v776
    %788 = vrot.lane.b32.xlu0 %v627, 112
    %v789 = vpop.permute.xlu0 %788
    %790 = vrot.lane.b32.xlu0 %v628, 112
    %v791 = vpop.permute.xlu0 %790
    %792 = vrot.lane.b32.xlu0 %v629, 112
    %v793 = vpop.permute.xlu0 %792
    %794 = vrot.lane.b32.xlu0 %v630, 112
    %v795 = vpop.permute.xlu0 %794
    %v796 = vsel %vm663, %v789, %v791
    %v797 = vsel %vm663, %v791, %v793
    %v798 = vsel %vm663, %v793, %v795
    %v803 = vmax.f32 %v784, %v796
    %v804 = vmax.f32 %v785, %v797
    %v805 = vmax.f32 %v786, %v798
    %v806 = vmax.f32 %v787, %v795
    %v807 = vld [vmem:[%s3] sm:$0xff]
    %v808 = vld [vmem:[%s3 + $0x8] sm:$0xff]
    %v809 = vld [vmem:[%s3 + $0x10] sm:$0xff]
    %v810 = vld [vmem:[%s3 + $0x18] sm:$0xff]
    %v811 = vld [vmem:[%s3 + $0x20] sm:$0xff]
    %v812 = vld [vmem:[%s3 + $0x28] sm:$0xff]
    %v813 = vld [vmem:[%s3 + $0x30] sm:$0xff]
    %v814 = vld [vmem:[%s3 + $0x38] sm:$0xff]
    %v815 = vld [vmem:[%s3 + $0x40] sm:$0xff]
    %v816 = vld [vmem:[%s3 + $0x48] sm:$0xff]
    %v817 = vld [vmem:[%s3 + $0x50] sm:$0xff]
    %v818 = vld [vmem:[%s3 + $0x58] sm:$0xff]
    %v819 = vld [vmem:[%s3 + $0x60] sm:$0xff]
    %v820 = vld [vmem:[%s3 + $0x68] sm:$0xff]
    %v821 = vld [vmem:[%s3 + $0x70] sm:$0xff]
    %v822 = vld [vmem:[%s3 + $0x78] sm:$0xff]
    %v823 = vld [vmem:[%s3 + $0x80] sm:$0xff]
    %v824 = vld [vmem:[%s3 + $0x88] sm:$0xff]
    %v825 = vld [vmem:[%s3 + $0x90] sm:$0xff]
    %v826 = vld [vmem:[%s3 + $0x98] sm:$0xff]
    %v827 = vld [vmem:[%s3 + $0xa0] sm:$0xff]
    %v828 = vld [vmem:[%s3 + $0xa8] sm:$0xff]
    %v829 = vld [vmem:[%s3 + $0xb0] sm:$0xff]
    %v830 = vld [vmem:[%s3 + $0xb8] sm:$0xff]
    %v831 = vld [vmem:[%s3 + $0xc0] sm:$0xff]
    %v832 = vld [vmem:[%s3 + $0xc8] sm:$0xff]
    %v833 = vld [vmem:[%s3 + $0xd0] sm:$0xff]
    %v834 = vld [vmem:[%s3 + $0xd8] sm:$0xff]
    %v835 = vld [vmem:[%s3 + $0xe0] sm:$0xff]
    %v836 = vld [vmem:[%s3 + $0xe8] sm:$0xff]
    %v837 = vld [vmem:[%s3 + $0xf0] sm:$0xff]
    %v838 = vld [vmem:[%s3 + $0xf8] sm:$0xff]
    %v839 = vld [vmem:[%s3 + $0x100] sm:$0xff]
    %v840 = vld [vmem:[%s3 + $0x108] sm:$0xff]
    %v841 = vld [vmem:[%s3 + $0x110] sm:$0xff]
    %v842 = vld [vmem:[%s3 + $0x118] sm:$0xff]
    %v843 = vld [vmem:[%s3 + $0x120] sm:$0xff]
    %v844 = vld [vmem:[%s3 + $0x128] sm:$0xff]
    %v845 = vld [vmem:[%s3 + $0x130] sm:$0xff]
    %v846 = vld [vmem:[%s3 + $0x138] sm:$0xff]
    %v847 = vld [vmem:[%s3 + $0x140] sm:$0xff]
    %v848 = vld [vmem:[%s3 + $0x148] sm:$0xff]
    %v849 = vld [vmem:[%s3 + $0x150] sm:$0xff]
    %v850 = vld [vmem:[%s3 + $0x158] sm:$0xff]
    %v851 = vld [vmem:[%s3 + $0x160] sm:$0xff]
    %v852 = vld [vmem:[%s3 + $0x168] sm:$0xff]
    %v853 = vld [vmem:[%s3 + $0x170] sm:$0xff]
    %v854 = vld [vmem:[%s3 + $0x178] sm:$0xff]
    %v855 = vld [vmem:[%s3 + $0x180] sm:$0xff]
    %v856 = vld [vmem:[%s3 + $0x188] sm:$0xff]
    %v857 = vld [vmem:[%s3 + $0x190] sm:$0xff]
    %v858 = vld [vmem:[%s3 + $0x198] sm:$0xff]
    %v859 = vld [vmem:[%s3 + $0x1a0] sm:$0xff]
    %v860 = vld [vmem:[%s3 + $0x1a8] sm:$0xff]
    %v861 = vld [vmem:[%s3 + $0x1b0] sm:$0xff]
    %v862 = vld [vmem:[%s3 + $0x1b8] sm:$0xff]
    %v863 = vld [vmem:[%s3 + $0x1c0] sm:$0xff]
    %v864 = vld [vmem:[%s3 + $0x1c8] sm:$0xff]
    %v865 = vld [vmem:[%s3 + $0x1d0] sm:$0xff]
    %v866 = vld [vmem:[%s3 + $0x1d8] sm:$0xff]
    %v867 = vld [vmem:[%s3 + $0x1e0] sm:$0xff]
    %v868 = vld [vmem:[%s3 + $0x1e8] sm:$0xff]
    %v869 = vld [vmem:[%s3 + $0x1f0] sm:$0xff]
    %v870 = vld [vmem:[%s3 + $0x1f8] sm:$0xff]
    %v871 = vld [vmem:[%s3 + $0x200] sm:$0xff]
    %v872 = vld [vmem:[%s3 + $0x208] sm:$0xff]
    %v873 = vld [vmem:[%s3 + $0x210] sm:$0xff]
    %v874 = vld [vmem:[%s3 + $0x218] sm:$0xff]
    %v875 = vld [vmem:[%s3 + $0x220] sm:$0xff]
    %v876 = vld [vmem:[%s3 + $0x228] sm:$0xff]
    %v877 = vld [vmem:[%s3 + $0x230] sm:$0xff]
    %v878 = vld [vmem:[%s3 + $0x238] sm:$0xff]
    %v879 = vld [vmem:[%s3 + $0x240] sm:$0xff]
    %v880 = vld [vmem:[%s3 + $0x248] sm:$0xff]
    %v881 = vld [vmem:[%s3 + $0x250] sm:$0xff]
    %v882 = vld [vmem:[%s3 + $0x258] sm:$0xff]
    %v883 = vld [vmem:[%s3 + $0x260] sm:$0xff]
    %v884 = vld [vmem:[%s3 + $0x268] sm:$0xff]
    %v885 = vld [vmem:[%s3 + $0x270] sm:$0xff]
    %v886 = vld [vmem:[%s3 + $0x278] sm:$0xff]
    %v887 = vld [vmem:[%s3 + $0x280] sm:$0xff]
    %v888 = vld [vmem:[%s3 + $0x288] sm:$0xff]
    %v889 = vld [vmem:[%s3 + $0x290] sm:$0xff]
    %v890 = vld [vmem:[%s3 + $0x298] sm:$0xff]
    %v891 = vld [vmem:[%s3 + $0x2a0] sm:$0xff]
    %v892 = vld [vmem:[%s3 + $0x2a8] sm:$0xff]
    %v893 = vld [vmem:[%s3 + $0x2b0] sm:$0xff]
    %v894 = vld [vmem:[%s3 + $0x2b8] sm:$0xff]
    %v895 = vld [vmem:[%s3 + $0x2c0] sm:$0xff]
    %v896 = vld [vmem:[%s3 + $0x2c8] sm:$0xff]
    %v897 = vld [vmem:[%s3 + $0x2d0] sm:$0xff]
    %v898 = vld [vmem:[%s3 + $0x2d8] sm:$0xff]
    %v899 = vld [vmem:[%s3 + $0x2e0] sm:$0xff]
    %v900 = vld [vmem:[%s3 + $0x2e8] sm:$0xff]
    %v901 = vld [vmem:[%s3 + $0x2f0] sm:$0xff]
    %v902 = vld [vmem:[%s3 + $0x2f8] sm:$0xff]
    %v903 = vld [vmem:[%s3 + $0x300] sm:$0xff]
    %v904 = vld [vmem:[%s3 + $0x308] sm:$0xff]
    %v905 = vld [vmem:[%s3 + $0x310] sm:$0xff]
    %v906 = vld [vmem:[%s3 + $0x318] sm:$0xff]
    %v907 = vld [vmem:[%s3 + $0x320] sm:$0xff]
    %v908 = vld [vmem:[%s3 + $0x328] sm:$0xff]
    %v909 = vld [vmem:[%s3 + $0x330] sm:$0xff]
    %v910 = vld [vmem:[%s3 + $0x338] sm:$0xff]
    %v911 = vld [vmem:[%s3 + $0x340] sm:$0xff]
    %v912 = vld [vmem:[%s3 + $0x348] sm:$0xff]
    %v913 = vld [vmem:[%s3 + $0x350] sm:$0xff]
    %v914 = vld [vmem:[%s3 + $0x358] sm:$0xff]
    %v915 = vld [vmem:[%s3 + $0x360] sm:$0xff]
    %v916 = vld [vmem:[%s3 + $0x368] sm:$0xff]
    %v917 = vld [vmem:[%s3 + $0x370] sm:$0xff]
    %v918 = vld [vmem:[%s3 + $0x378] sm:$0xff]
    %v919 = vld [vmem:[%s3 + $0x380] sm:$0xff]
    %v920 = vld [vmem:[%s3 + $0x388] sm:$0xff]
    %v921 = vld [vmem:[%s3 + $0x390] sm:$0xff]
    %v922 = vld [vmem:[%s3 + $0x398] sm:$0xff]
    %v923 = vld [vmem:[%s4] sm:$0x3]
    %v925 = vperm.slane %v923, 0
    %v926 = vperm.slane %v923, 1
    %vm929 = vcmask 654336
    %v931 = vsel %vm929, %v806, 0
    %933 = vmatpush.msra.mxu0 %v837
    %934 = vmatpush.msra.mxu0 %v835
    %935 = vmatpush.msra.mxu0 %v833
    %936 = vmatpush.msra.mxu0 %v831
    %937 = vmatpush.msra.mxu0 %v829
    %938 = vmatpush.msra.mxu0 %v827
    %939 = vmatpush.msra.mxu0 %v825
    %940 = vmatpush.msra.mxu0 %v823
    %941 = vmatpush.msra.mxu0 %v821
    %942 = vmatpush.msra.mxu0 %v819
    %943 = vmatpush.msra.mxu0 %v817
    %944 = vmatpush.msra.mxu0 %v815
    %945 = vmatpush.msra.mxu0 %v813
    %946 = vmatpush.msra.mxu0 %v811
    %947 = vmatpush.msra.mxu0 %v809
    %948 = vmatpush.msra.mxu0 %v807
    %949 = vmatmul.f32.gmra.mxu0 %v803
    %v950 = vpop.f32.mrf.mxu0
    %v951 = vadd.f32 %v925, %v950
    %952 = vdwg.mxu0
    %953 = vmatpush.msra.mxu0 %v869
    %954 = vmatpush.msra.mxu0 %v867
    %955 = vmatpush.msra.mxu0 %v865
    %956 = vmatpush.msra.mxu0 %v863
    %957 = vmatpush.msra.mxu0 %v861
    %958 = vmatpush.msra.mxu0 %v859
    %959 = vmatpush.msra.mxu0 %v857
    %960 = vmatpush.msra.mxu0 %v855
    %961 = vmatpush.msra.mxu0 %v853
    %962 = vmatpush.msra.mxu0 %v851
    %963 = vmatpush.msra.mxu0 %v849
    %964 = vmatpush.msra.mxu0 %v847
    %965 = vmatpush.msra.mxu0 %v845
    %966 = vmatpush.msra.mxu0 %v843
    %967 = vmatpush.msra.mxu0 %v841
    %968 = vmatpush.msra.mxu0 %v839
    %969 = vmatmul.f32.gmra.mxu0 %v804
    %v970 = vpop.f32.mrf.mxu0
    %v971 = vadd.f32 %v951, %v970
    %972 = vdwg.mxu0
    %973 = vmatpush.msra.mxu0 %v901
    %974 = vmatpush.msra.mxu0 %v899
    %975 = vmatpush.msra.mxu0 %v897
    %976 = vmatpush.msra.mxu0 %v895
    %977 = vmatpush.msra.mxu0 %v893
    %978 = vmatpush.msra.mxu0 %v891
    %979 = vmatpush.msra.mxu0 %v889
    %980 = vmatpush.msra.mxu0 %v887
    %981 = vmatpush.msra.mxu0 %v885
    %982 = vmatpush.msra.mxu0 %v883
    %983 = vmatpush.msra.mxu0 %v881
    %984 = vmatpush.msra.mxu0 %v879
    %985 = vmatpush.msra.mxu0 %v877
    %986 = vmatpush.msra.mxu0 %v875
    %987 = vmatpush.msra.mxu0 %v873
    %988 = vmatpush.msra.mxu0 %v871
    %989 = vmatmul.f32.gmra.mxu0 %v805
    %v990 = vpop.f32.mrf.mxu0
    %v991 = vadd.f32 %v971, %v990
    %992 = vdwg.mxu0
    %993 = vmatpush.msra.mxu0 0.0
    %994 = vmatpush.msra.mxu0 0.0
    %995 = vmatpush.msra.mxu0 0.0
    %996 = vmatpush.msra.mxu0 0.0
    %997 = vmatpush.msra.mxu0 0.0
    %998 = vmatpush.msra.mxu0 0.0
    %999 = vmatpush.msra.mxu0 %v921
    %1000 = vmatpush.msra.mxu0 %v919
    %1001 = vmatpush.msra.mxu0 %v917
    %1002 = vmatpush.msra.mxu0 %v915
    %1003 = vmatpush.msra.mxu0 %v913
    %1004 = vmatpush.msra.mxu0 %v911
    %1005 = vmatpush.msra.mxu0 %v909
    %1006 = vmatpush.msra.mxu0 %v907
    %1007 = vmatpush.msra.mxu0 %v905
    %1008 = vmatpush.msra.mxu0 %v903
    %1009 = vmatmul.f32.gmra.mxu0 %v931
    %v1010 = vpop.f32.mrf.mxu0
    %v1011 = vadd.f32 %v991, %v1010
    %1012 = vdwg.mxu0
    %1013 = vmatpush.msra.mxu0 %v838
    %1014 = vmatpush.msra.mxu0 %v836
    %1015 = vmatpush.msra.mxu0 %v834
    %1016 = vmatpush.msra.mxu0 %v832
    %1017 = vmatpush.msra.mxu0 %v830
    %1018 = vmatpush.msra.mxu0 %v828
    %1019 = vmatpush.msra.mxu0 %v826
    %1020 = vmatpush.msra.mxu0 %v824
    %1021 = vmatpush.msra.mxu0 %v822
    %1022 = vmatpush.msra.mxu0 %v820
    %1023 = vmatpush.msra.mxu0 %v818
    %1024 = vmatpush.msra.mxu0 %v816
    %1025 = vmatpush.msra.mxu0 %v814
    %1026 = vmatpush.msra.mxu0 %v812
    %1027 = vmatpush.msra.mxu0 %v810
    %1028 = vmatpush.msra.mxu0 %v808
    %1029 = vmatmul.f32.gmra.mxu0 %v803
    %v1030 = vpop.f32.mrf.mxu0
    %v1031 = vadd.f32 %v926, %v1030
    %1032 = vdwg.mxu0
    %1033 = vmatpush.msra.mxu0 %v870
    %1034 = vmatpush.msra.mxu0 %v868
    %1035 = vmatpush.msra.mxu0 %v866
    %1036 = vmatpush.msra.mxu0 %v864
    %1037 = vmatpush.msra.mxu0 %v862
    %1038 = vmatpush.msra.mxu0 %v860
    %1039 = vmatpush.msra.mxu0 %v858
    %1040 = vmatpush.msra.mxu0 %v856
    %1041 = vmatpush.msra.mxu0 %v854
    %1042 = vmatpush.msra.mxu0 %v852
    %1043 = vmatpush.msra.mxu0 %v850
    %1044 = vmatpush.msra.mxu0 %v848
    %1045 = vmatpush.msra.mxu0 %v846
    %1046 = vmatpush.msra.mxu0 %v844
    %1047 = vmatpush.msra.mxu0 %v842
    %1048 = vmatpush.msra.mxu0 %v840
    %1049 = vmatmul.f32.gmra.mxu0 %v804
    %v1050 = vpop.f32.mrf.mxu0
    %v1051 = vadd.f32 %v1031, %v1050
    %1052 = vdwg.mxu0
    %1053 = vmatpush.msra.mxu0 %v902
    %1054 = vmatpush.msra.mxu0 %v900
    %1055 = vmatpush.msra.mxu0 %v898
    %1056 = vmatpush.msra.mxu0 %v896
    %1057 = vmatpush.msra.mxu0 %v894
    %1058 = vmatpush.msra.mxu0 %v892
    %1059 = vmatpush.msra.mxu0 %v890
    %1060 = vmatpush.msra.mxu0 %v888
    %1061 = vmatpush.msra.mxu0 %v886
    %1062 = vmatpush.msra.mxu0 %v884
    %1063 = vmatpush.msra.mxu0 %v882
    %1064 = vmatpush.msra.mxu0 %v880
    %1065 = vmatpush.msra.mxu0 %v878
    %1066 = vmatpush.msra.mxu0 %v876
    %1067 = vmatpush.msra.mxu0 %v874
    %1068 = vmatpush.msra.mxu0 %v872
    %1069 = vmatmul.f32.gmra.mxu0 %v805
    %v1070 = vpop.f32.mrf.mxu0
    %v1071 = vadd.f32 %v1051, %v1070
    %1072 = vdwg.mxu0
    %1073 = vmatpush.msra.mxu0 0.0
    %1074 = vmatpush.msra.mxu0 0.0
    %1075 = vmatpush.msra.mxu0 0.0
    %1076 = vmatpush.msra.mxu0 0.0
    %1077 = vmatpush.msra.mxu0 0.0
    %1078 = vmatpush.msra.mxu0 0.0
    %1079 = vmatpush.msra.mxu0 %v922
    %1080 = vmatpush.msra.mxu0 %v920
    %1081 = vmatpush.msra.mxu0 %v918
    %1082 = vmatpush.msra.mxu0 %v916
    %1083 = vmatpush.msra.mxu0 %v914
    %1084 = vmatpush.msra.mxu0 %v912
    %1085 = vmatpush.msra.mxu0 %v910
    %1086 = vmatpush.msra.mxu0 %v908
    %1087 = vmatpush.msra.mxu0 %v906
    %1088 = vmatpush.msra.mxu0 %v904
    %1089 = vmatmul.f32.gmra.mxu0 %v931
    %v1090 = vpop.f32.mrf.mxu0
    %v1091 = vadd.f32 %v1071, %v1090
    %1092 = vdwg.mxu0
    %v1093 = vmax.f32 %v1011, 0.0
    %v1094 = vmax.f32 %v1091, 0.0
    %1096 = vrot.lane.b32.xlu0 %v1093, 120
    %v1097 = vpop.permute.xlu0 %1096
    %v1099 = vmax.f32 %v1093, %v1097
    %1100 = vrot.lane.b32.xlu0 %v1093, 112
    %v1101 = vpop.permute.xlu0 %1100
    %v1103 = vmax.f32 %v1099, %v1101
    %1104 = vrot.lane.b32.xlu0 %v1093, 104
    %v1105 = vpop.permute.xlu0 %1104
    %v1107 = vmax.f32 %v1103, %v1105
    %1108 = vrot.lane.b32.xlu0 %v1093, 96
    %v1109 = vpop.permute.xlu0 %1108
    %v1111 = vmax.f32 %v1107, %v1109
    %1113 = vrot.lane.b32.xlu0 %v1093, 24
    %v1114 = vpop.permute.xlu0 %1113
    %1115 = vrot.lane.b32.xlu0 %v1094, 24
    %v1116 = vpop.permute.xlu0 %1115
    %vm1117 = vcmask 195584
    %v1118 = vsel %vm1117, %v1114, %v1116
    %v1120 = vmax.f32 %v1111, %v1118
    %1121 = vrot.lane.b32.xlu0 %v1093, 16
    %v1122 = vpop.permute.xlu0 %1121
    %1123 = vrot.lane.b32.xlu0 %v1094, 16
    %v1124 = vpop.permute.xlu0 %1123
    %v1125 = vsel %vm729, %v1122, %v1124
    %v1127 = vmax.f32 %v1120, %v1125
    %1128 = vrot.lane.b32.xlu0 %v1093, 8
    %v1129 = vpop.permute.xlu0 %1128
    %1130 = vrot.lane.b32.xlu0 %v1094, 8
    %v1131 = vpop.permute.xlu0 %1130
    %v1132 = vsel %vm752, %v1129, %v1131
    %v1134 = vmax.f32 %v1127, %v1132
    %v1135 = vmax.f32 %v1134, %v1094
    %1136 = vrot.lane.b32.xlu0 %v1094, 120
    %v1137 = vpop.permute.xlu0 %1136
    %v1139 = vmax.f32 %v1135, %v1137
    %v1140 = vld [vmem:[%s5] sm:$0xff]
    %v1141 = vld [vmem:[%s5 + $0x8] sm:$0xff]
    %v1142 = vld [vmem:[%s5 + $0x10] sm:$0xff]
    %v1143 = vld [vmem:[%s5 + $0x18] sm:$0xff]
    %v1144 = vld [vmem:[%s5 + $0x20] sm:$0xff]
    %v1145 = vld [vmem:[%s5 + $0x28] sm:$0xff]
    %v1146 = vld [vmem:[%s5 + $0x30] sm:$0xff]
    %v1147 = vld [vmem:[%s5 + $0x38] sm:$0xff]
    %v1148 = vld [vmem:[%s6] sm:$0x1]
    %v1150 = vperm.slane %v1148, 0
    %vm1152 = vcmask 523264
    %v1154 = vsel %vm1152, %v1139, 0
    %1156 = vmatpush.msra.mxu0 0.0
    %1157 = vmatpush.msra.mxu0 0.0
    %1158 = vmatpush.msra.mxu0 0.0
    %1159 = vmatpush.msra.mxu0 0.0
    %1160 = vmatpush.msra.mxu0 0.0
    %1161 = vmatpush.msra.mxu0 0.0
    %1162 = vmatpush.msra.mxu0 0.0
    %1163 = vmatpush.msra.mxu0 0.0
    %1164 = vmatpush.msra.mxu0 %v1147
    %1165 = vmatpush.msra.mxu0 %v1146
    %1166 = vmatpush.msra.mxu0 %v1145
    %1167 = vmatpush.msra.mxu0 %v1144
    %1168 = vmatpush.msra.mxu0 %v1143
    %1169 = vmatpush.msra.mxu0 %v1142
    %1170 = vmatpush.msra.mxu0 %v1141
    %1171 = vmatpush.msra.mxu0 %v1140
    %1172 = vmatmul.f32.gmra.mxu0 %v1154
    %v1173 = vpop.f32.mrf.mxu0
    %v1174 = vadd.f32 %v1150, %v1173
    %1175 = vdwg.mxu0
    %1176 = vst [vmem:[#allocation2] sm:$0xff] %v1174
    // Predicated region
    $region30: #{tpu_custom_call.1} parent=1 // pred_check
      _
    $region31: #{tpu_custom_call.1} parent=1 // pred_check_branch
      %1178 = sbr.rel (0) target = $region33
    $region32: #{tpu_custom_call.1} parent=1 // pred_region
      %1180 = vsyncadd [#allocation3], 0
      %s1182 = sshll.u32 [#allocation2], 4
      %s1183 = int_to_ptr.vmem [resolvable:$true] %s1182
      %s1184 = sshll.u32 %s7, 4
      %s1185 = int_to_ptr.hbm [resolvable:$true] %s1184
      %1187 = dma.vmem_to_hbm [thread:$0]  %s1183, 128, %s1185, [#allocation3]
    $region33: #{tpu_custom_call.1} parent=1 // pred_fallthru
      _
    // Predicated region
    $region34: #{tpu_custom_call.1} parent=1 // pred_check
      _
    $region35: #{tpu_custom_call.1} parent=1 // pred_check_branch
      %1189 = sbr.rel (0) target = $region37
    $region36: #{tpu_custom_call.1} parent=1 // pred_region
      %1191 = dma.done [#allocation3], 128
    $region37: #{tpu_custom_call.1} parent=1 // pred_fallthru
      _
    %1192 = vsyncpa [#allocation3], 1

// kernel: tpu_custom_call.1
$region0: #{tpu_custom_call.1}
  #allocation0 [shape = 'u32[]', space=smem, size = 0x4, offset = 0x4, fixed_abs, tag = 'smem constant byte address 0x4 - core index']
  #allocation1 [shape = 'u32[72,128]{1,0:T(1,128)}', space=vmem, size = 0x9000, scoped, tag = 'internal scratch']
  %s0 = inlined_call_operand.vmem [shape: f32[8,256], index: 0, kind: input, shape index: {}]
  %s1 = inlined_call_operand.vmem [shape: f32[256,992], index: 1, kind: input, shape index: {}]
  %s2 = inlined_call_operand.vmem [shape: f32[1,992], index: 2, kind: input, shape index: {}]
  %s3 = inlined_call_operand.vmem [shape: f32[464,200], index: 3, kind: input, shape index: {}]
  %s4 = inlined_call_operand.vmem [shape: f32[1,200], index: 4, kind: input, shape index: {}]
  %s5 = inlined_call_operand.vmem [shape: f32[64,128], index: 5, kind: input, shape index: {}]
  %s6 = inlined_call_operand.vmem [shape: f32[1,128], index: 6, kind: input, shape index: {}]
  %s7 = inlined_call_operand.hbm [shape: f32[8,128], index: 7, kind: output, shape index: {}]
  %s8 = sld [smem:[#allocation0]]
  $region38: #{tpu_custom_call.1} parent=0
    _
  %s10 = ssub.s32 1, %s8
  %s11 = scalar_select 0, %s10, %s8
  $region1: #{tpu_custom_call.1} parent=0
    #allocation2 [shape = 'u8[4096]{0}', space=vmem, size = 0x1000, scoped, tag = 'output window, operand 0, single buffered']
    #allocation3 [shape = 's32[1]{0}', space=sflag, size = 0x4, scoped, tag = 'scoped memory for tpu_custom_call.1']
    %12 = vsyncpa [#allocation3], 0
    // Predicated region
    $region2: #{tpu_custom_call.1} parent=1 // pred_check
      _
    $region3: #{tpu_custom_call.1} parent=1 // pred_check_branch
      %14 = sbr.rel (0) target = $region5
    $region4: #{tpu_custom_call.1} parent=1 // pred_region
      _
    $region5: #{tpu_custom_call.1} parent=1 // pred_fallthru
      _
    // Predicated region
    $region6: #{tpu_custom_call.1} parent=1 // pred_check
      _
    $region7: #{tpu_custom_call.1} parent=1 // pred_check_branch
      %16 = sbr.rel (0) target = $region9
    $region8: #{tpu_custom_call.1} parent=1 // pred_region
      _
    $region9: #{tpu_custom_call.1} parent=1 // pred_fallthru
      _
    // Predicated region
    $region10: #{tpu_custom_call.1} parent=1 // pred_check
      _
    $region11: #{tpu_custom_call.1} parent=1 // pred_check_branch
      %18 = sbr.rel (0) target = $region13
    $region12: #{tpu_custom_call.1} parent=1 // pred_region
      _
    $region13: #{tpu_custom_call.1} parent=1 // pred_fallthru
      _
    // Predicated region
    $region14: #{tpu_custom_call.1} parent=1 // pred_check
      _
    $region15: #{tpu_custom_call.1} parent=1 // pred_check_branch
      %20 = sbr.rel (0) target = $region17
    $region16: #{tpu_custom_call.1} parent=1 // pred_region
      _
    $region17: #{tpu_custom_call.1} parent=1 // pred_fallthru
      _
    // Predicated region
    $region18: #{tpu_custom_call.1} parent=1 // pred_check
      _
    $region19: #{tpu_custom_call.1} parent=1 // pred_check_branch
      %22 = sbr.rel (0) target = $region21
    $region20: #{tpu_custom_call.1} parent=1 // pred_region
      _
    $region21: #{tpu_custom_call.1} parent=1 // pred_fallthru
      _
    // Predicated region
    $region22: #{tpu_custom_call.1} parent=1 // pred_check
      _
    $region23: #{tpu_custom_call.1} parent=1 // pred_check_branch
      %24 = sbr.rel (0) target = $region25
    $region24: #{tpu_custom_call.1} parent=1 // pred_region
      _
    $region25: #{tpu_custom_call.1} parent=1 // pred_fallthru
      _
    // Predicated region
    $region26: #{tpu_custom_call.1} parent=1 // pred_check
      _
    $region27: #{tpu_custom_call.1} parent=1 // pred_check_branch
      %26 = sbr.rel (0) target = $region29
    $region28: #{tpu_custom_call.1} parent=1 // pred_region
      _
    $region29: #{tpu_custom_call.1} parent=1 // pred_fallthru
      _
    %v27 = vld [vmem:[%s0] sm:$0xff]
    %v28 = vld [vmem:[%s0 + $0x8] sm:$0xff]
    %v29 = vld [vmem:[%s1] sm:$0xff]
    %v30 = vld [vmem:[%s1 + $0x8] sm:$0xff]
    %v31 = vld [vmem:[%s1 + $0x10] sm:$0xff]
    %v32 = vld [vmem:[%s1 + $0x18] sm:$0xff]
    %v33 = vld [vmem:[%s1 + $0x20] sm:$0xff]
    %v34 = vld [vmem:[%s1 + $0x28] sm:$0xff]
    %v35 = vld [vmem:[%s1 + $0x30] sm:$0xff]
    %v36 = vld [vmem:[%s1 + $0x38] sm:$0xff]
    %v37 = vld [vmem:[%s1 + $0x40] sm:$0xff]
    %v38 = vld [vmem:[%s1 + $0x48] sm:$0xff]
    %v39 = vld [vmem:[%s1 + $0x50] sm:$0xff]
    %v40 = vld [vmem:[%s1 + $0x58] sm:$0xff]
    %v41 = vld [vmem:[%s1 + $0x60] sm:$0xff]
    %v42 = vld [vmem:[%s1 + $0x68] sm:$0xff]
    %v43 = vld [vmem:[%s1 + $0x70] sm:$0xff]
    %v44 = vld [vmem:[%s1 + $0x78] sm:$0xff]
    %v45 = vld [vmem:[%s1 + $0x80] sm:$0xff]
    %v46 = vld [vmem:[%s1 + $0x88] sm:$0xff]
    %v47 = vld [vmem:[%s1 + $0x90] sm:$0xff]
    %v48 = vld [vmem:[%s1 + $0x98] sm:$0xff]
    %v49 = vld [vmem:[%s1 + $0xa0] sm:$0xff]
    %v50 = vld [vmem:[%s1 + $0xa8] sm:$0xff]
    %v51 = vld [vmem:[%s1 + $0xb0] sm:$0xff]
    %v52 = vld [vmem:[%s1 + $0xb8] sm:$0xff]
    %v53 = vld [vmem:[%s1 + $0xc0] sm:$0xff]
    %v54 = vld [vmem:[%s1 + $0xc8] sm:$0xff]
    %v55 = vld [vmem:[%s1 + $0xd0] sm:$0xff]
    %v56 = vld [vmem:[%s1 + $0xd8] sm:$0xff]
    %v57 = vld [vmem:[%s1 + $0xe0] sm:$0xff]
    %v58 = vld [vmem:[%s1 + $0xe8] sm:$0xff]
    %v59 = vld [vmem:[%s1 + $0xf0] sm:$0xff]
    %v60 = vld [vmem:[%s1 + $0xf8] sm:$0xff]
    %v61 = vld [vmem:[%s1 + $0x100] sm:$0xff]
    %v62 = vld [vmem:[%s1 + $0x108] sm:$0xff]
    %v63 = vld [vmem:[%s1 + $0x110] sm:$0xff]
    %v64 = vld [vmem:[%s1 + $0x118] sm:$0xff]
    %v65 = vld [vmem:[%s1 + $0x120] sm:$0xff]
    %v66 = vld [vmem:[%s1 + $0x128] sm:$0xff]
    %v67 = vld [vmem:[%s1 + $0x130] sm:$0xff]
    %v68 = vld [vmem:[%s1 + $0x138] sm:$0xff]
    %v69 = vld [vmem:[%s1 + $0x140] sm:$0xff]
    %v70 = vld [vmem:[%s1 + $0x148] sm:$0xff]
    %v71 = vld [vmem:[%s1 + $0x150] sm:$0xff]
    %v72 = vld [vmem:[%s1 + $0x158] sm:$0xff]
    %v73 = vld [vmem:[%s1 + $0x160] sm:$0xff]
    %v74 = vld [vmem:[%s1 + $0x168] sm:$0xff]
    %v75 = vld [vmem:[%s1 + $0x170] sm:$0xff]
    %v76 = vld [vmem:[%s1 + $0x178] sm:$0xff]
    %v77 = vld [vmem:[%s1 + $0x180] sm:$0xff]
    %v78 = vld [vmem:[%s1 + $0x188] sm:$0xff]
    %v79 = vld [vmem:[%s1 + $0x190] sm:$0xff]
    %v80 = vld [vmem:[%s1 + $0x198] sm:$0xff]
    %v81 = vld [vmem:[%s1 + $0x1a0] sm:$0xff]
    %v82 = vld [vmem:[%s1 + $0x1a8] sm:$0xff]
    %v83 = vld [vmem:[%s1 + $0x1b0] sm:$0xff]
    %v84 = vld [vmem:[%s1 + $0x1b8] sm:$0xff]
    %v85 = vld [vmem:[%s1 + $0x1c0] sm:$0xff]
    %v86 = vld [vmem:[%s1 + $0x1c8] sm:$0xff]
    %v87 = vld [vmem:[%s1 + $0x1d0] sm:$0xff]
    %v88 = vld [vmem:[%s1 + $0x1d8] sm:$0xff]
    %v89 = vld [vmem:[%s1 + $0x1e0] sm:$0xff]
    %v90 = vld [vmem:[%s1 + $0x1e8] sm:$0xff]
    %v91 = vld [vmem:[%s1 + $0x1f0] sm:$0xff]
    %v92 = vld [vmem:[%s1 + $0x1f8] sm:$0xff]
    %v93 = vld [vmem:[%s1 + $0x200] sm:$0xff]
    %v94 = vld [vmem:[%s1 + $0x208] sm:$0xff]
    %v95 = vld [vmem:[%s1 + $0x210] sm:$0xff]
    %v96 = vld [vmem:[%s1 + $0x218] sm:$0xff]
    %v97 = vld [vmem:[%s1 + $0x220] sm:$0xff]
    %v98 = vld [vmem:[%s1 + $0x228] sm:$0xff]
    %v99 = vld [vmem:[%s1 + $0x230] sm:$0xff]
    %v100 = vld [vmem:[%s1 + $0x238] sm:$0xff]
    %v101 = vld [vmem:[%s1 + $0x240] sm:$0xff]
    %v102 = vld [vmem:[%s1 + $0x248] sm:$0xff]
    %v103 = vld [vmem:[%s1 + $0x250] sm:$0xff]
    %v104 = vld [vmem:[%s1 + $0x258] sm:$0xff]
    %v105 = vld [vmem:[%s1 + $0x260] sm:$0xff]
    %v106 = vld [vmem:[%s1 + $0x268] sm:$0xff]
    %v107 = vld [vmem:[%s1 + $0x270] sm:$0xff]
    %v108 = vld [vmem:[%s1 + $0x278] sm:$0xff]
    %v109 = vld [vmem:[%s1 + $0x280] sm:$0xff]
    %v110 = vld [vmem:[%s1 + $0x288] sm:$0xff]
    %v111 = vld [vmem:[%s1 + $0x290] sm:$0xff]
    %v112 = vld [vmem:[%s1 + $0x298] sm:$0xff]
    %v113 = vld [vmem:[%s1 + $0x2a0] sm:$0xff]
    %v114 = vld [vmem:[%s1 + $0x2a8] sm:$0xff]
    %v115 = vld [vmem:[%s1 + $0x2b0] sm:$0xff]
    %v116 = vld [vmem:[%s1 + $0x2b8] sm:$0xff]
    %v117 = vld [vmem:[%s1 + $0x2c0] sm:$0xff]
    %v118 = vld [vmem:[%s1 + $0x2c8] sm:$0xff]
    %v119 = vld [vmem:[%s1 + $0x2d0] sm:$0xff]
    %v120 = vld [vmem:[%s1 + $0x2d8] sm:$0xff]
    %v121 = vld [vmem:[%s1 + $0x2e0] sm:$0xff]
    %v122 = vld [vmem:[%s1 + $0x2e8] sm:$0xff]
    %v123 = vld [vmem:[%s1 + $0x2f0] sm:$0xff]
    %v124 = vld [vmem:[%s1 + $0x2f8] sm:$0xff]
    %v125 = vld [vmem:[%s1 + $0x300] sm:$0xff]
    %v126 = vld [vmem:[%s1 + $0x308] sm:$0xff]
    %v127 = vld [vmem:[%s1 + $0x310] sm:$0xff]
    %v128 = vld [vmem:[%s1 + $0x318] sm:$0xff]
    %v129 = vld [vmem:[%s1 + $0x320] sm:$0xff]
    %v130 = vld [vmem:[%s1 + $0x328] sm:$0xff]
    %v131 = vld [vmem:[%s1 + $0x330] sm:$0xff]
    %v132 = vld [vmem:[%s1 + $0x338] sm:$0xff]
    %v133 = vld [vmem:[%s1 + $0x340] sm:$0xff]
    %v134 = vld [vmem:[%s1 + $0x348] sm:$0xff]
    %v135 = vld [vmem:[%s1 + $0x350] sm:$0xff]
    %v136 = vld [vmem:[%s1 + $0x358] sm:$0xff]
    %v137 = vld [vmem:[%s1 + $0x360] sm:$0xff]
    %v138 = vld [vmem:[%s1 + $0x368] sm:$0xff]
    %v139 = vld [vmem:[%s1 + $0x370] sm:$0xff]
    %v140 = vld [vmem:[%s1 + $0x378] sm:$0xff]
    %v141 = vld [vmem:[%s1 + $0x380] sm:$0xff]
    %v142 = vld [vmem:[%s1 + $0x388] sm:$0xff]
    %v143 = vld [vmem:[%s1 + $0x390] sm:$0xff]
    %v144 = vld [vmem:[%s1 + $0x398] sm:$0xff]
    %v145 = vld [vmem:[%s1 + $0x3a0] sm:$0xff]
    %v146 = vld [vmem:[%s1 + $0x3a8] sm:$0xff]
    %v147 = vld [vmem:[%s1 + $0x3b0] sm:$0xff]
    %v148 = vld [vmem:[%s1 + $0x3b8] sm:$0xff]
    %v149 = vld [vmem:[%s1 + $0x3c0] sm:$0xff]
    %v150 = vld [vmem:[%s1 + $0x3c8] sm:$0xff]
    %v151 = vld [vmem:[%s1 + $0x3d0] sm:$0xff]
    %v152 = vld [vmem:[%s1 + $0x3d8] sm:$0xff]
    %v153 = vld [vmem:[%s1 + $0x3e0] sm:$0xff]
    %v154 = vld [vmem:[%s1 + $0x3e8] sm:$0xff]
    %v155 = vld [vmem:[%s1 + $0x3f0] sm:$0xff]
    %v156 = vld [vmem:[%s1 + $0x3f8] sm:$0xff]
    %v157 = vld [vmem:[%s1 + $0x400] sm:$0xff]
    %v158 = vld [vmem:[%s1 + $0x408] sm:$0xff]
    %v159 = vld [vmem:[%s1 + $0x410] sm:$0xff]
    %v160 = vld [vmem:[%s1 + $0x418] sm:$0xff]
    %v161 = vld [vmem:[%s1 + $0x420] sm:$0xff]
    %v162 = vld [vmem:[%s1 + $0x428] sm:$0xff]
    %v163 = vld [vmem:[%s1 + $0x430] sm:$0xff]
    %v164 = vld [vmem:[%s1 + $0x438] sm:$0xff]
    %v165 = vld [vmem:[%s1 + $0x440] sm:$0xff]
    %v166 = vld [vmem:[%s1 + $0x448] sm:$0xff]
    %v167 = vld [vmem:[%s1 + $0x450] sm:$0xff]
    %v168 = vld [vmem:[%s1 + $0x458] sm:$0xff]
    %v169 = vld [vmem:[%s1 + $0x460] sm:$0xff]
    %v170 = vld [vmem:[%s1 + $0x468] sm:$0xff]
    %v171 = vld [vmem:[%s1 + $0x470] sm:$0xff]
    %v172 = vld [vmem:[%s1 + $0x478] sm:$0xff]
    %v173 = vld [vmem:[%s1 + $0x480] sm:$0xff]
    %v174 = vld [vmem:[%s1 + $0x488] sm:$0xff]
    %v175 = vld [vmem:[%s1 + $0x490] sm:$0xff]
    %v176 = vld [vmem:[%s1 + $0x498] sm:$0xff]
    %v177 = vld [vmem:[%s1 + $0x4a0] sm:$0xff]
    %v178 = vld [vmem:[%s1 + $0x4a8] sm:$0xff]
    %v179 = vld [vmem:[%s1 + $0x4b0] sm:$0xff]
    %v180 = vld [vmem:[%s1 + $0x4b8] sm:$0xff]
    %v181 = vld [vmem:[%s1 + $0x4c0] sm:$0xff]
    %v182 = vld [vmem:[%s1 + $0x4c8] sm:$0xff]
    %v183 = vld [vmem:[%s1 + $0x4d0] sm:$0xff]
    %v184 = vld [vmem:[%s1 + $0x4d8] sm:$0xff]
    %v185 = vld [vmem:[%s1 + $0x4e0] sm:$0xff]
    %v186 = vld [vmem:[%s1 + $0x4e8] sm:$0xff]
    %v187 = vld [vmem:[%s1 + $0x4f0] sm:$0xff]
    %v188 = vld [vmem:[%s1 + $0x4f8] sm:$0xff]
    %v189 = vld [vmem:[%s1 + $0x500] sm:$0xff]
    %v190 = vld [vmem:[%s1 + $0x508] sm:$0xff]
    %v191 = vld [vmem:[%s1 + $0x510] sm:$0xff]
    %v192 = vld [vmem:[%s1 + $0x518] sm:$0xff]
    %v193 = vld [vmem:[%s1 + $0x520] sm:$0xff]
    %v194 = vld [vmem:[%s1 + $0x528] sm:$0xff]
    %v195 = vld [vmem:[%s1 + $0x530] sm:$0xff]
    %v196 = vld [vmem:[%s1 + $0x538] sm:$0xff]
    %v197 = vld [vmem:[%s1 + $0x540] sm:$0xff]
    %v198 = vld [vmem:[%s1 + $0x548] sm:$0xff]
    %v199 = vld [vmem:[%s1 + $0x550] sm:$0xff]
    %v200 = vld [vmem:[%s1 + $0x558] sm:$0xff]
    %v201 = vld [vmem:[%s1 + $0x560] sm:$0xff]
    %v202 = vld [vmem:[%s1 + $0x568] sm:$0xff]
    %v203 = vld [vmem:[%s1 + $0x570] sm:$0xff]
    %v204 = vld [vmem:[%s1 + $0x578] sm:$0xff]
    %v205 = vld [vmem:[%s1 + $0x580] sm:$0xff]
    %v206 = vld [vmem:[%s1 + $0x588] sm:$0xff]
    %v207 = vld [vmem:[%s1 + $0x590] sm:$0xff]
    %v208 = vld [vmem:[%s1 + $0x598] sm:$0xff]
    %v209 = vld [vmem:[%s1 + $0x5a0] sm:$0xff]
    %v210 = vld [vmem:[%s1 + $0x5a8] sm:$0xff]
    %v211 = vld [vmem:[%s1 + $0x5b0] sm:$0xff]
    %v212 = vld [vmem:[%s1 + $0x5b8] sm:$0xff]
    %v213 = vld [vmem:[%s1 + $0x5c0] sm:$0xff]
    %v214 = vld [vmem:[%s1 + $0x5c8] sm:$0xff]
    %v215 = vld [vmem:[%s1 + $0x5d0] sm:$0xff]
    %v216 = vld [vmem:[%s1 + $0x5d8] sm:$0xff]
    %v217 = vld [vmem:[%s1 + $0x5e0] sm:$0xff]
    %v218 = vld [vmem:[%s1 + $0x5e8] sm:$0xff]
    %v219 = vld [vmem:[%s1 + $0x5f0] sm:$0xff]
    %v220 = vld [vmem:[%s1 + $0x5f8] sm:$0xff]
    %v221 = vld [vmem:[%s1 + $0x600] sm:$0xff]
    %v222 = vld [vmem:[%s1 + $0x608] sm:$0xff]
    %v223 = vld [vmem:[%s1 + $0x610] sm:$0xff]
    %v224 = vld [vmem:[%s1 + $0x618] sm:$0xff]
    %v225 = vld [vmem:[%s1 + $0x620] sm:$0xff]
    %v226 = vld [vmem:[%s1 + $0x628] sm:$0xff]
    %v227 = vld [vmem:[%s1 + $0x630] sm:$0xff]
    %v228 = vld [vmem:[%s1 + $0x638] sm:$0xff]
    %v229 = vld [vmem:[%s1 + $0x640] sm:$0xff]
    %v230 = vld [vmem:[%s1 + $0x648] sm:$0xff]
    %v231 = vld [vmem:[%s1 + $0x650] sm:$0xff]
    %v232 = vld [vmem:[%s1 + $0x658] sm:$0xff]
    %v233 = vld [vmem:[%s1 + $0x660] sm:$0xff]
    %v234 = vld [vmem:[%s1 + $0x668] sm:$0xff]
    %v235 = vld [vmem:[%s1 + $0x670] sm:$0xff]
    %v236 = vld [vmem:[%s1 + $0x678] sm:$0xff]
    %v237 = vld [vmem:[%s1 + $0x680] sm:$0xff]
    %v238 = vld [vmem:[%s1 + $0x688] sm:$0xff]
    %v239 = vld [vmem:[%s1 + $0x690] sm:$0xff]
    %v240 = vld [vmem:[%s1 + $0x698] sm:$0xff]
    %v241 = vld [vmem:[%s1 + $0x6a0] sm:$0xff]
    %v242 = vld [vmem:[%s1 + $0x6a8] sm:$0xff]
    %v243 = vld [vmem:[%s1 + $0x6b0] sm:$0xff]
    %v244 = vld [vmem:[%s1 + $0x6b8] sm:$0xff]
    %v245 = vld [vmem:[%s1 + $0x6c0] sm:$0xff]
    %v246 = vld [vmem:[%s1 + $0x6c8] sm:$0xff]
    %v247 = vld [vmem:[%s1 + $0x6d0] sm:$0xff]
    %v248 = vld [vmem:[%s1 + $0x6d8] sm:$0xff]
    %v249 = vld [vmem:[%s1 + $0x6e0] sm:$0xff]
    %v250 = vld [vmem:[%s1 + $0x6e8] sm:$0xff]
    %v251 = vld [vmem:[%s1 + $0x6f0] sm:$0xff]
    %v252 = vld [vmem:[%s1 + $0x6f8] sm:$0xff]
    %v253 = vld [vmem:[%s1 + $0x700] sm:$0xff]
    %v254 = vld [vmem:[%s1 + $0x708] sm:$0xff]
    %v255 = vld [vmem:[%s1 + $0x710] sm:$0xff]
    %v256 = vld [vmem:[%s1 + $0x718] sm:$0xff]
    %v257 = vld [vmem:[%s1 + $0x720] sm:$0xff]
    %v258 = vld [vmem:[%s1 + $0x728] sm:$0xff]
    %v259 = vld [vmem:[%s1 + $0x730] sm:$0xff]
    %v260 = vld [vmem:[%s1 + $0x738] sm:$0xff]
    %v261 = vld [vmem:[%s1 + $0x740] sm:$0xff]
    %v262 = vld [vmem:[%s1 + $0x748] sm:$0xff]
    %v263 = vld [vmem:[%s1 + $0x750] sm:$0xff]
    %v264 = vld [vmem:[%s1 + $0x758] sm:$0xff]
    %v265 = vld [vmem:[%s1 + $0x760] sm:$0xff]
    %v266 = vld [vmem:[%s1 + $0x768] sm:$0xff]
    %v267 = vld [vmem:[%s1 + $0x770] sm:$0xff]
    %v268 = vld [vmem:[%s1 + $0x778] sm:$0xff]
    %v269 = vld [vmem:[%s1 + $0x780] sm:$0xff]
    %v270 = vld [vmem:[%s1 + $0x788] sm:$0xff]
    %v271 = vld [vmem:[%s1 + $0x790] sm:$0xff]
    %v272 = vld [vmem:[%s1 + $0x798] sm:$0xff]
    %v273 = vld [vmem:[%s1 + $0x7a0] sm:$0xff]
    %v274 = vld [vmem:[%s1 + $0x7a8] sm:$0xff]
    %v275 = vld [vmem:[%s1 + $0x7b0] sm:$0xff]
    %v276 = vld [vmem:[%s1 + $0x7b8] sm:$0xff]
    %v277 = vld [vmem:[%s1 + $0x7c0] sm:$0xff]
    %v278 = vld [vmem:[%s1 + $0x7c8] sm:$0xff]
    %v279 = vld [vmem:[%s1 + $0x7d0] sm:$0xff]
    %v280 = vld [vmem:[%s1 + $0x7d8] sm:$0xff]
    %v281 = vld [vmem:[%s1 + $0x7e0] sm:$0xff]
    %v282 = vld [vmem:[%s1 + $0x7e8] sm:$0xff]
    %v283 = vld [vmem:[%s1 + $0x7f0] sm:$0xff]
    %v284 = vld [vmem:[%s1 + $0x7f8] sm:$0xff]
    %v285 = vld [vmem:[%s2] sm:$0xff]
    %v287 = vperm.slane %v285, 0
    %v288 = vperm.slane %v285, 1
    %v289 = vperm.slane %v285, 2
    %v290 = vperm.slane %v285, 3
    %v291 = vperm.slane %v285, 4
    %v292 = vperm.slane %v285, 5
    %v293 = vperm.slane %v285, 6
    %v294 = vperm.slane %v285, 7
    %303 = vmatpush.msra.mxu0 %v149
    %304 = vmatpush.msra.mxu0 %v141
    %305 = vmatpush.msra.mxu0 %v133
    %306 = vmatpush.msra.mxu0 %v125
    %307 = vmatpush.msra.mxu0 %v117
    %308 = vmatpush.msra.mxu0 %v109
    %309 = vmatpush.msra.mxu0 %v101
    %310 = vmatpush.msra.mxu0 %v93
    %311 = vmatpush.msra.mxu0 %v85
    %312 = vmatpush.msra.mxu0 %v77
    %313 = vmatpush.msra.mxu0 %v69
    %314 = vmatpush.msra.mxu0 %v61
    %315 = vmatpush.msra.mxu0 %v53
    %316 = vmatpush.msra.mxu0 %v45
    %317 = vmatpush.msra.mxu0 %v37
    %318 = vmatpush.msra.mxu0 %v29
    %319 = vmatmul.f32.gmra.mxu0 %v27
    %v320 = vpop.f32.mrf.mxu0
    %v321 = vadd.f32 %v287, %v320
    %322 = vdwg.mxu0
    %323 = vmatpush.msra.mxu0 %v277
    %324 = vmatpush.msra.mxu0 %v269
    %325 = vmatpush.msra.mxu0 %v261
    %326 = vmatpush.msra.mxu0 %v253
    %327 = vmatpush.msra.mxu0 %v245
    %328 = vmatpush.msra.mxu0 %v237
    %329 = vmatpush.msra.mxu0 %v229
    %330 = vmatpush.msra.mxu0 %v221
    %331 = vmatpush.msra.mxu0 %v213
    %332 = vmatpush.msra.mxu0 %v205
    %333 = vmatpush.msra.mxu0 %v197
    %334 = vmatpush.msra.mxu0 %v189
    %335 = vmatpush.msra.mxu0 %v181
    %336 = vmatpush.msra.mxu0 %v173
    %337 = vmatpush.msra.mxu0 %v165
    %338 = vmatpush.msra.mxu0 %v157
    %339 = vmatmul.f32.gmra.mxu0 %v28
    %v340 = vpop.f32.mrf.mxu0
    %v341 = vadd.f32 %v321, %v340
    %342 = vdwg.mxu0
    %343 = vmatpush.msra.mxu0 %v150
    %344 = vmatpush.msra.mxu0 %v142
    %345 = vmatpush.msra.mxu0 %v134
    %346 = vmatpush.msra.mxu0 %v126
    %347 = vmatpush.msra.mxu0 %v118
    %348 = vmatpush.msra.mxu0 %v110
    %349 = vmatpush.msra.mxu0 %v102
    %350 = vmatpush.msra.mxu0 %v94
    %351 = vmatpush.msra.mxu0 %v86
    %352 = vmatpush.msra.mxu0 %v78
    %353 = vmatpush.msra.mxu0 %v70
    %354 = vmatpush.msra.mxu0 %v62
    %355 = vmatpush.msra.mxu0 %v54
    %356 = vmatpush.msra.mxu0 %v46
    %357 = vmatpush.msra.mxu0 %v38
    %358 = vmatpush.msra.mxu0 %v30
    %359 = vmatmul.f32.gmra.mxu0 %v27
    %v360 = vpop.f32.mrf.mxu0
    %v361 = vadd.f32 %v288, %v360
    %362 = vdwg.mxu0
    %363 = vmatpush.msra.mxu0 %v278
    %364 = vmatpush.msra.mxu0 %v270
    %365 = vmatpush.msra.mxu0 %v262
    %366 = vmatpush.msra.mxu0 %v254
    %367 = vmatpush.msra.mxu0 %v246
    %368 = vmatpush.msra.mxu0 %v238
    %369 = vmatpush.msra.mxu0 %v230
    %370 = vmatpush.msra.mxu0 %v222
    %371 = vmatpush.msra.mxu0 %v214
    %372 = vmatpush.msra.mxu0 %v206
    %373 = vmatpush.msra.mxu0 %v198
    %374 = vmatpush.msra.mxu0 %v190
    %375 = vmatpush.msra.mxu0 %v182
    %376 = vmatpush.msra.mxu0 %v174
    %377 = vmatpush.msra.mxu0 %v166
    %378 = vmatpush.msra.mxu0 %v158
    %379 = vmatmul.f32.gmra.mxu0 %v28
    %v380 = vpop.f32.mrf.mxu0
    %v381 = vadd.f32 %v361, %v380
    %382 = vdwg.mxu0
    %383 = vmatpush.msra.mxu0 %v151
    %384 = vmatpush.msra.mxu0 %v143
    %385 = vmatpush.msra.mxu0 %v135
    %386 = vmatpush.msra.mxu0 %v127
    %387 = vmatpush.msra.mxu0 %v119
    %388 = vmatpush.msra.mxu0 %v111
    %389 = vmatpush.msra.mxu0 %v103
    %390 = vmatpush.msra.mxu0 %v95
    %391 = vmatpush.msra.mxu0 %v87
    %392 = vmatpush.msra.mxu0 %v79
    %393 = vmatpush.msra.mxu0 %v71
    %394 = vmatpush.msra.mxu0 %v63
    %395 = vmatpush.msra.mxu0 %v55
    %396 = vmatpush.msra.mxu0 %v47
    %397 = vmatpush.msra.mxu0 %v39
    %398 = vmatpush.msra.mxu0 %v31
    %399 = vmatmul.f32.gmra.mxu0 %v27
    %v400 = vpop.f32.mrf.mxu0
    %v401 = vadd.f32 %v289, %v400
    %402 = vdwg.mxu0
    %403 = vmatpush.msra.mxu0 %v279
    %404 = vmatpush.msra.mxu0 %v271
    %405 = vmatpush.msra.mxu0 %v263
    %406 = vmatpush.msra.mxu0 %v255
    %407 = vmatpush.msra.mxu0 %v247
    %408 = vmatpush.msra.mxu0 %v239
    %409 = vmatpush.msra.mxu0 %v231
    %410 = vmatpush.msra.mxu0 %v223
    %411 = vmatpush.msra.mxu0 %v215
    %412 = vmatpush.msra.mxu0 %v207
    %413 = vmatpush.msra.mxu0 %v199
    %414 = vmatpush.msra.mxu0 %v191
    %415 = vmatpush.msra.mxu0 %v183
    %416 = vmatpush.msra.mxu0 %v175
    %417 = vmatpush.msra.mxu0 %v167
    %418 = vmatpush.msra.mxu0 %v159
    %419 = vmatmul.f32.gmra.mxu0 %v28
    %v420 = vpop.f32.mrf.mxu0
    %v421 = vadd.f32 %v401, %v420
    %422 = vdwg.mxu0
    %423 = vmatpush.msra.mxu0 %v152
    %424 = vmatpush.msra.mxu0 %v144
    %425 = vmatpush.msra.mxu0 %v136
    %426 = vmatpush.msra.mxu0 %v128
    %427 = vmatpush.msra.mxu0 %v120
    %428 = vmatpush.msra.mxu0 %v112
    %429 = vmatpush.msra.mxu0 %v104
    %430 = vmatpush.msra.mxu0 %v96
    %431 = vmatpush.msra.mxu0 %v88
    %432 = vmatpush.msra.mxu0 %v80
    %433 = vmatpush.msra.mxu0 %v72
    %434 = vmatpush.msra.mxu0 %v64
    %435 = vmatpush.msra.mxu0 %v56
    %436 = vmatpush.msra.mxu0 %v48
    %437 = vmatpush.msra.mxu0 %v40
    %438 = vmatpush.msra.mxu0 %v32
    %439 = vmatmul.f32.gmra.mxu0 %v27
    %v440 = vpop.f32.mrf.mxu0
    %v441 = vadd.f32 %v290, %v440
    %442 = vdwg.mxu0
    %443 = vmatpush.msra.mxu0 %v280
    %444 = vmatpush.msra.mxu0 %v272
    %445 = vmatpush.msra.mxu0 %v264
    %446 = vmatpush.msra.mxu0 %v256
    %447 = vmatpush.msra.mxu0 %v248
    %448 = vmatpush.msra.mxu0 %v240
    %449 = vmatpush.msra.mxu0 %v232
    %450 = vmatpush.msra.mxu0 %v224
    %451 = vmatpush.msra.mxu0 %v216
    %452 = vmatpush.msra.mxu0 %v208
    %453 = vmatpush.msra.mxu0 %v200
    %454 = vmatpush.msra.mxu0 %v192
    %455 = vmatpush.msra.mxu0 %v184
    %456 = vmatpush.msra.mxu0 %v176
    %457 = vmatpush.msra.mxu0 %v168
    %458 = vmatpush.msra.mxu0 %v160
    %459 = vmatmul.f32.gmra.mxu0 %v28
    %v460 = vpop.f32.mrf.mxu0
    %v461 = vadd.f32 %v441, %v460
    %462 = vdwg.mxu0
    %463 = vmatpush.msra.mxu0 %v153
    %464 = vmatpush.msra.mxu0 %v145
    %465 = vmatpush.msra.mxu0 %v137
    %466 = vmatpush.msra.mxu0 %v129
    %467 = vmatpush.msra.mxu0 %v121
    %468 = vmatpush.msra.mxu0 %v113
    %469 = vmatpush.msra.mxu0 %v105
    %470 = vmatpush.msra.mxu0 %v97
    %471 = vmatpush.msra.mxu0 %v89
    %472 = vmatpush.msra.mxu0 %v81
    %473 = vmatpush.msra.mxu0 %v73
    %474 = vmatpush.msra.mxu0 %v65
    %475 = vmatpush.msra.mxu0 %v57
    %476 = vmatpush.msra.mxu0 %v49
    %477 = vmatpush.msra.mxu0 %v41
    %478 = vmatpush.msra.mxu0 %v33
    %479 = vmatmul.f32.gmra.mxu0 %v27
    %v480 = vpop.f32.mrf.mxu0
    %v481 = vadd.f32 %v291, %v480
    %482 = vdwg.mxu0
    %483 = vmatpush.msra.mxu0 %v281
    %484 = vmatpush.msra.mxu0 %v273
    %485 = vmatpush.msra.mxu0 %v265
    %486 = vmatpush.msra.mxu0 %v257
    %487 = vmatpush.msra.mxu0 %v249
    %488 = vmatpush.msra.mxu0 %v241
    %489 = vmatpush.msra.mxu0 %v233
    %490 = vmatpush.msra.mxu0 %v225
    %491 = vmatpush.msra.mxu0 %v217
    %492 = vmatpush.msra.mxu0 %v209
    %493 = vmatpush.msra.mxu0 %v201
    %494 = vmatpush.msra.mxu0 %v193
    %495 = vmatpush.msra.mxu0 %v185
    %496 = vmatpush.msra.mxu0 %v177
    %497 = vmatpush.msra.mxu0 %v169
    %498 = vmatpush.msra.mxu0 %v161
    %499 = vmatmul.f32.gmra.mxu0 %v28
    %v500 = vpop.f32.mrf.mxu0
    %v501 = vadd.f32 %v481, %v500
    %502 = vdwg.mxu0
    %503 = vmatpush.msra.mxu0 %v154
    %504 = vmatpush.msra.mxu0 %v146
    %505 = vmatpush.msra.mxu0 %v138
    %506 = vmatpush.msra.mxu0 %v130
    %507 = vmatpush.msra.mxu0 %v122
    %508 = vmatpush.msra.mxu0 %v114
    %509 = vmatpush.msra.mxu0 %v106
    %510 = vmatpush.msra.mxu0 %v98
    %511 = vmatpush.msra.mxu0 %v90
    %512 = vmatpush.msra.mxu0 %v82
    %513 = vmatpush.msra.mxu0 %v74
    %514 = vmatpush.msra.mxu0 %v66
    %515 = vmatpush.msra.mxu0 %v58
    %516 = vmatpush.msra.mxu0 %v50
    %517 = vmatpush.msra.mxu0 %v42
    %518 = vmatpush.msra.mxu0 %v34
    %519 = vmatmul.f32.gmra.mxu0 %v27
    %v520 = vpop.f32.mrf.mxu0
    %v521 = vadd.f32 %v292, %v520
    %522 = vdwg.mxu0
    %523 = vmatpush.msra.mxu0 %v282
    %524 = vmatpush.msra.mxu0 %v274
    %525 = vmatpush.msra.mxu0 %v266
    %526 = vmatpush.msra.mxu0 %v258
    %527 = vmatpush.msra.mxu0 %v250
    %528 = vmatpush.msra.mxu0 %v242
    %529 = vmatpush.msra.mxu0 %v234
    %530 = vmatpush.msra.mxu0 %v226
    %531 = vmatpush.msra.mxu0 %v218
    %532 = vmatpush.msra.mxu0 %v210
    %533 = vmatpush.msra.mxu0 %v202
    %534 = vmatpush.msra.mxu0 %v194
    %535 = vmatpush.msra.mxu0 %v186
    %536 = vmatpush.msra.mxu0 %v178
    %537 = vmatpush.msra.mxu0 %v170
    %538 = vmatpush.msra.mxu0 %v162
    %539 = vmatmul.f32.gmra.mxu0 %v28
    %v540 = vpop.f32.mrf.mxu0
    %v541 = vadd.f32 %v521, %v540
    %542 = vdwg.mxu0
    %543 = vmatpush.msra.mxu0 %v155
    %544 = vmatpush.msra.mxu0 %v147
    %545 = vmatpush.msra.mxu0 %v139
    %546 = vmatpush.msra.mxu0 %v131
    %547 = vmatpush.msra.mxu0 %v123
    %548 = vmatpush.msra.mxu0 %v115
    %549 = vmatpush.msra.mxu0 %v107
    %550 = vmatpush.msra.mxu0 %v99
    %551 = vmatpush.msra.mxu0 %v91
    %552 = vmatpush.msra.mxu0 %v83
    %553 = vmatpush.msra.mxu0 %v75
    %554 = vmatpush.msra.mxu0 %v67
    %555 = vmatpush.msra.mxu0 %v59
    %556 = vmatpush.msra.mxu0 %v51
    %557 = vmatpush.msra.mxu0 %v43
    %558 = vmatpush.msra.mxu0 %v35
    %559 = vmatmul.f32.gmra.mxu0 %v27
    %v560 = vpop.f32.mrf.mxu0
    %v561 = vadd.f32 %v293, %v560
    %562 = vdwg.mxu0
    %563 = vmatpush.msra.mxu0 %v283
    %564 = vmatpush.msra.mxu0 %v275
    %565 = vmatpush.msra.mxu0 %v267
    %566 = vmatpush.msra.mxu0 %v259
    %567 = vmatpush.msra.mxu0 %v251
    %568 = vmatpush.msra.mxu0 %v243
    %569 = vmatpush.msra.mxu0 %v235
    %570 = vmatpush.msra.mxu0 %v227
    %571 = vmatpush.msra.mxu0 %v219
    %572 = vmatpush.msra.mxu0 %v211
    %573 = vmatpush.msra.mxu0 %v203
    %574 = vmatpush.msra.mxu0 %v195
    %575 = vmatpush.msra.mxu0 %v187
    %576 = vmatpush.msra.mxu0 %v179
    %577 = vmatpush.msra.mxu0 %v171
    %578 = vmatpush.msra.mxu0 %v163
    %579 = vmatmul.f32.gmra.mxu0 %v28
    %v580 = vpop.f32.mrf.mxu0
    %v581 = vadd.f32 %v561, %v580
    %582 = vdwg.mxu0
    %583 = vmatpush.msra.mxu0 %v156
    %584 = vmatpush.msra.mxu0 %v148
    %585 = vmatpush.msra.mxu0 %v140
    %586 = vmatpush.msra.mxu0 %v132
    %587 = vmatpush.msra.mxu0 %v124
    %588 = vmatpush.msra.mxu0 %v116
    %589 = vmatpush.msra.mxu0 %v108
    %590 = vmatpush.msra.mxu0 %v100
    %591 = vmatpush.msra.mxu0 %v92
    %592 = vmatpush.msra.mxu0 %v84
    %593 = vmatpush.msra.mxu0 %v76
    %594 = vmatpush.msra.mxu0 %v68
    %595 = vmatpush.msra.mxu0 %v60
    %596 = vmatpush.msra.mxu0 %v52
    %597 = vmatpush.msra.mxu0 %v44
    %598 = vmatpush.msra.mxu0 %v36
    %599 = vmatmul.f32.gmra.mxu0 %v27
    %v600 = vpop.f32.mrf.mxu0
    %v601 = vadd.f32 %v294, %v600
    %602 = vdwg.mxu0
    %603 = vmatpush.msra.mxu0 %v284
    %604 = vmatpush.msra.mxu0 %v276
    %605 = vmatpush.msra.mxu0 %v268
    %606 = vmatpush.msra.mxu0 %v260
    %607 = vmatpush.msra.mxu0 %v252
    %608 = vmatpush.msra.mxu0 %v244
    %609 = vmatpush.msra.mxu0 %v236
    %610 = vmatpush.msra.mxu0 %v228
    %611 = vmatpush.msra.mxu0 %v220
    %612 = vmatpush.msra.mxu0 %v212
    %613 = vmatpush.msra.mxu0 %v204
    %614 = vmatpush.msra.mxu0 %v196
    %615 = vmatpush.msra.mxu0 %v188
    %616 = vmatpush.msra.mxu0 %v180
    %617 = vmatpush.msra.mxu0 %v172
    %618 = vmatpush.msra.mxu0 %v164
    %619 = vmatmul.f32.gmra.mxu0 %v28
    %v620 = vpop.f32.mrf.mxu0
    %v621 = vadd.f32 %v601, %v620
    %622 = vdwg.mxu0
    %v623 = vmax.f32 %v341, 0.0
    %v624 = vmax.f32 %v381, 0.0
    %v625 = vmax.f32 %v421, 0.0
    %v626 = vmax.f32 %v461, 0.0
    %v627 = vmax.f32 %v501, 0.0
    %v628 = vmax.f32 %v541, 0.0
    %v629 = vmax.f32 %v581, 0.0
    %v630 = vmax.f32 %v621, 0.0
    %635 = vrot.lane.b32.xlu0 %v623, 120
    %v636 = vpop.permute.xlu0 %635
    %637 = vrot.lane.b32.xlu0 %v624, 120
    %v638 = vpop.permute.xlu0 %637
    %639 = vrot.lane.b32.xlu0 %v625, 120
    %v640 = vpop.permute.xlu0 %639
    %641 = vrot.lane.b32.xlu0 %v626, 120
    %v642 = vpop.permute.xlu0 %641
    %vm643 = vcmask 982016
    %v644 = vsel %vm643, %v636, %v638
    %v645 = vsel %vm643, %v638, %v640
    %v646 = vsel %vm643, %v640, %v642
    %v651 = vmax.f32 %v623, %v644
    %v652 = vmax.f32 %v624, %v645
    %v653 = vmax.f32 %v625, %v646
    %v654 = vmax.f32 %v626, %v642
    %655 = vrot.lane.b32.xlu0 %v623, 112
    %v656 = vpop.permute.xlu0 %655
    %657 = vrot.lane.b32.xlu0 %v624, 112
    %v658 = vpop.permute.xlu0 %657
    %659 = vrot.lane.b32.xlu0 %v625, 112
    %v660 = vpop.permute.xlu0 %659
    %661 = vrot.lane.b32.xlu0 %v626, 112
    %v662 = vpop.permute.xlu0 %661
    %vm663 = vcmask 916480
    %v664 = vsel %vm663, %v656, %v658
    %v665 = vsel %vm663, %v658, %v660
    %v666 = vsel %vm663, %v660, %v662
    %v671 = vmax.f32 %v651, %v664
    %v672 = vmax.f32 %v652, %v665
    %v673 = vmax.f32 %v653, %v666
    %v674 = vmax.f32 %v654, %v662
    %675 = vrot.lane.b32.xlu0 %v623, 104
    %v676 = vpop.permute.xlu0 %675
    %677 = vrot.lane.b32.xlu0 %v624, 104
    %v678 = vpop.permute.xlu0 %677
    %679 = vrot.lane.b32.xlu0 %v625, 104
    %v680 = vpop.permute.xlu0 %679
    %681 = vrot.lane.b32.xlu0 %v626, 104
    %v682 = vpop.permute.xlu0 %681
    %vm683 = vcmask 850944
    %v684 = vsel %vm683, %v676, %v678
    %v685 = vsel %vm683, %v678, %v680
    %v686 = vsel %vm683, %v680, %v682
    %v691 = vmax.f32 %v671, %v684
    %v692 = vmax.f32 %v672, %v685
    %v693 = vmax.f32 %v673, %v686
    %v694 = vmax.f32 %v674, %v682
    %695 = vrot.lane.b32.xlu0 %v623, 96
    %v696 = vpop.permute.xlu0 %695
    %697 = vrot.lane.b32.xlu0 %v624, 96
    %v698 = vpop.permute.xlu0 %697
    %699 = vrot.lane.b32.xlu0 %v625, 96
    %v700 = vpop.permute.xlu0 %699
    %701 = vrot.lane.b32.xlu0 %v626, 96
    %v702 = vpop.permute.xlu0 %701
    %vm703 = vcmask 785408
    %v704 = vsel %vm703, %v696, %v698
    %v705 = vsel %vm703, %v698, %v700
    %v706 = vsel %vm703, %v700, %v702
    %v711 = vmax.f32 %v691, %v704
    %v712 = vmax.f32 %v692, %v705
    %v713 = vmax.f32 %v693, %v706
    %v714 = vmax.f32 %v694, %v702
    %719 = vrot.lane.b32.xlu0 %v626, 16
    %v720 = vpop.permute.xlu0 %719
    %721 = vrot.lane.b32.xlu0 %v627, 16
    %v722 = vpop.permute.xlu0 %721
    %723 = vrot.lane.b32.xlu0 %v628, 16
    %v724 = vpop.permute.xlu0 %723
    %725 = vrot.lane.b32.xlu0 %v629, 16
    %v726 = vpop.permute.xlu0 %725
    %727 = vrot.lane.b32.xlu0 %v630, 16
    %v728 = vpop.permute.xlu0 %727
    %vm729 = vcmask 130048
    %v730 = vsel %vm729, %v720, %v722
    %v731 = vsel %vm729, %v722, %v724
    %v732 = vsel %vm729, %v724, %v726
    %v733 = vsel %vm729, %v726, %v728
    %v738 = vmax.f32 %v711, %v730
    %v739 = vmax.f32 %v712, %v731
    %v740 = vmax.f32 %v713, %v732
    %v741 = vmax.f32 %v714, %v733
    %742 = vrot.lane.b32.xlu0 %v626, 8
    %v743 = vpop.permute.xlu0 %742
    %744 = vrot.lane.b32.xlu0 %v627, 8
    %v745 = vpop.permute.xlu0 %744
    %746 = vrot.lane.b32.xlu0 %v628, 8
    %v747 = vpop.permute.xlu0 %746
    %748 = vrot.lane.b32.xlu0 %v629, 8
    %v749 = vpop.permute.xlu0 %748
    %750 = vrot.lane.b32.xlu0 %v630, 8
    %v751 = vpop.permute.xlu0 %750
    %vm752 = vcmask 64512
    %v753 = vsel %vm752, %v743, %v745
    %v754 = vsel %vm752, %v745, %v747
    %v755 = vsel %vm752, %v747, %v749
    %v756 = vsel %vm752, %v749, %v751
    %v761 = vmax.f32 %v738, %v753
    %v762 = vmax.f32 %v739, %v754
    %v763 = vmax.f32 %v740, %v755
    %v764 = vmax.f32 %v741, %v756
    %v765 = vmax.f32 %v761, %v627
    %v766 = vmax.f32 %v762, %v628
    %v767 = vmax.f32 %v763, %v629
    %v768 = vmax.f32 %v764, %v630
    %769 = vrot.lane.b32.xlu0 %v627, 120
    %v770 = vpop.permute.xlu0 %769
    %771 = vrot.lane.b32.xlu0 %v628, 120
    %v772 = vpop.permute.xlu0 %771
    %773 = vrot.lane.b32.xlu0 %v629, 120
    %v774 = vpop.permute.xlu0 %773
    %775 = vrot.lane.b32.xlu0 %v630, 120
    %v776 = vpop.permute.xlu0 %775
    %v777 = vsel %vm643, %v770, %v772
    %v778 = vsel %vm643, %v772, %v774
    %v779 = vsel %vm643, %v774, %v776
    %v784 = vmax.f32 %v765, %v777
    %v785 = vmax.f32 %v766, %v778
    %v786 = vmax.f32 %v767, %v779
    %v787 = vmax.f32 %v768, %v776
    %788 = vrot.lane.b32.xlu0 %v627, 112
    %v789 = vpop.permute.xlu0 %788
    %790 = vrot.lane.b32.xlu0 %v628, 112
    %v791 = vpop.permute.xlu0 %790
    %792 = vrot.lane.b32.xlu0 %v629, 112
    %v793 = vpop.permute.xlu0 %792
    %794 = vrot.lane.b32.xlu0 %v630, 112
    %v795 = vpop.permute.xlu0 %794
    %v796 = vsel %vm663, %v789, %v791
    %v797 = vsel %vm663, %v791, %v793
    %v798 = vsel %vm663, %v793, %v795
    %v803 = vmax.f32 %v784, %v796
    %v804 = vmax.f32 %v785, %v797
    %v805 = vmax.f32 %v786, %v798
    %v806 = vmax.f32 %v787, %v795
    %v807 = vld [vmem:[%s3] sm:$0xff]
    %v808 = vld [vmem:[%s3 + $0x8] sm:$0xff]
    %v809 = vld [vmem:[%s3 + $0x10] sm:$0xff]
    %v810 = vld [vmem:[%s3 + $0x18] sm:$0xff]
    %v811 = vld [vmem:[%s3 + $0x20] sm:$0xff]
    %v812 = vld [vmem:[%s3 + $0x28] sm:$0xff]
    %v813 = vld [vmem:[%s3 + $0x30] sm:$0xff]
    %v814 = vld [vmem:[%s3 + $0x38] sm:$0xff]
    %v815 = vld [vmem:[%s3 + $0x40] sm:$0xff]
    %v816 = vld [vmem:[%s3 + $0x48] sm:$0xff]
    %v817 = vld [vmem:[%s3 + $0x50] sm:$0xff]
    %v818 = vld [vmem:[%s3 + $0x58] sm:$0xff]
    %v819 = vld [vmem:[%s3 + $0x60] sm:$0xff]
    %v820 = vld [vmem:[%s3 + $0x68] sm:$0xff]
    %v821 = vld [vmem:[%s3 + $0x70] sm:$0xff]
    %v822 = vld [vmem:[%s3 + $0x78] sm:$0xff]
    %v823 = vld [vmem:[%s3 + $0x80] sm:$0xff]
    %v824 = vld [vmem:[%s3 + $0x88] sm:$0xff]
    %v825 = vld [vmem:[%s3 + $0x90] sm:$0xff]
    %v826 = vld [vmem:[%s3 + $0x98] sm:$0xff]
    %v827 = vld [vmem:[%s3 + $0xa0] sm:$0xff]
    %v828 = vld [vmem:[%s3 + $0xa8] sm:$0xff]
    %v829 = vld [vmem:[%s3 + $0xb0] sm:$0xff]
    %v830 = vld [vmem:[%s3 + $0xb8] sm:$0xff]
    %v831 = vld [vmem:[%s3 + $0xc0] sm:$0xff]
    %v832 = vld [vmem:[%s3 + $0xc8] sm:$0xff]
    %v833 = vld [vmem:[%s3 + $0xd0] sm:$0xff]
    %v834 = vld [vmem:[%s3 + $0xd8] sm:$0xff]
    %v835 = vld [vmem:[%s3 + $0xe0] sm:$0xff]
    %v836 = vld [vmem:[%s3 + $0xe8] sm:$0xff]
    %v837 = vld [vmem:[%s3 + $0xf0] sm:$0xff]
    %v838 = vld [vmem:[%s3 + $0xf8] sm:$0xff]
    %v839 = vld [vmem:[%s3 + $0x100] sm:$0xff]
    %v840 = vld [vmem:[%s3 + $0x108] sm:$0xff]
    %v841 = vld [vmem:[%s3 + $0x110] sm:$0xff]
    %v842 = vld [vmem:[%s3 + $0x118] sm:$0xff]
    %v843 = vld [vmem:[%s3 + $0x120] sm:$0xff]
    %v844 = vld [vmem:[%s3 + $0x128] sm:$0xff]
    %v845 = vld [vmem:[%s3 + $0x130] sm:$0xff]
    %v846 = vld [vmem:[%s3 + $0x138] sm:$0xff]
    %v847 = vld [vmem:[%s3 + $0x140] sm:$0xff]
    %v848 = vld [vmem:[%s3 + $0x148] sm:$0xff]
    %v849 = vld [vmem:[%s3 + $0x150] sm:$0xff]
    %v850 = vld [vmem:[%s3 + $0x158] sm:$0xff]
    %v851 = vld [vmem:[%s3 + $0x160] sm:$0xff]
    %v852 = vld [vmem:[%s3 + $0x168] sm:$0xff]
    %v853 = vld [vmem:[%s3 + $0x170] sm:$0xff]
    %v854 = vld [vmem:[%s3 + $0x178] sm:$0xff]
    %v855 = vld [vmem:[%s3 + $0x180] sm:$0xff]
    %v856 = vld [vmem:[%s3 + $0x188] sm:$0xff]
    %v857 = vld [vmem:[%s3 + $0x190] sm:$0xff]
    %v858 = vld [vmem:[%s3 + $0x198] sm:$0xff]
    %v859 = vld [vmem:[%s3 + $0x1a0] sm:$0xff]
    %v860 = vld [vmem:[%s3 + $0x1a8] sm:$0xff]
    %v861 = vld [vmem:[%s3 + $0x1b0] sm:$0xff]
    %v862 = vld [vmem:[%s3 + $0x1b8] sm:$0xff]
    %v863 = vld [vmem:[%s3 + $0x1c0] sm:$0xff]
    %v864 = vld [vmem:[%s3 + $0x1c8] sm:$0xff]
    %v865 = vld [vmem:[%s3 + $0x1d0] sm:$0xff]
    %v866 = vld [vmem:[%s3 + $0x1d8] sm:$0xff]
    %v867 = vld [vmem:[%s3 + $0x1e0] sm:$0xff]
    %v868 = vld [vmem:[%s3 + $0x1e8] sm:$0xff]
    %v869 = vld [vmem:[%s3 + $0x1f0] sm:$0xff]
    %v870 = vld [vmem:[%s3 + $0x1f8] sm:$0xff]
    %v871 = vld [vmem:[%s3 + $0x200] sm:$0xff]
    %v872 = vld [vmem:[%s3 + $0x208] sm:$0xff]
    %v873 = vld [vmem:[%s3 + $0x210] sm:$0xff]
    %v874 = vld [vmem:[%s3 + $0x218] sm:$0xff]
    %v875 = vld [vmem:[%s3 + $0x220] sm:$0xff]
    %v876 = vld [vmem:[%s3 + $0x228] sm:$0xff]
    %v877 = vld [vmem:[%s3 + $0x230] sm:$0xff]
    %v878 = vld [vmem:[%s3 + $0x238] sm:$0xff]
    %v879 = vld [vmem:[%s3 + $0x240] sm:$0xff]
    %v880 = vld [vmem:[%s3 + $0x248] sm:$0xff]
    %v881 = vld [vmem:[%s3 + $0x250] sm:$0xff]
    %v882 = vld [vmem:[%s3 + $0x258] sm:$0xff]
    %v883 = vld [vmem:[%s3 + $0x260] sm:$0xff]
    %v884 = vld [vmem:[%s3 + $0x268] sm:$0xff]
    %v885 = vld [vmem:[%s3 + $0x270] sm:$0xff]
    %v886 = vld [vmem:[%s3 + $0x278] sm:$0xff]
    %v887 = vld [vmem:[%s3 + $0x280] sm:$0xff]
    %v888 = vld [vmem:[%s3 + $0x288] sm:$0xff]
    %v889 = vld [vmem:[%s3 + $0x290] sm:$0xff]
    %v890 = vld [vmem:[%s3 + $0x298] sm:$0xff]
    %v891 = vld [vmem:[%s3 + $0x2a0] sm:$0xff]
    %v892 = vld [vmem:[%s3 + $0x2a8] sm:$0xff]
    %v893 = vld [vmem:[%s3 + $0x2b0] sm:$0xff]
    %v894 = vld [vmem:[%s3 + $0x2b8] sm:$0xff]
    %v895 = vld [vmem:[%s3 + $0x2c0] sm:$0xff]
    %v896 = vld [vmem:[%s3 + $0x2c8] sm:$0xff]
    %v897 = vld [vmem:[%s3 + $0x2d0] sm:$0xff]
    %v898 = vld [vmem:[%s3 + $0x2d8] sm:$0xff]
    %v899 = vld [vmem:[%s3 + $0x2e0] sm:$0xff]
    %v900 = vld [vmem:[%s3 + $0x2e8] sm:$0xff]
    %v901 = vld [vmem:[%s3 + $0x2f0] sm:$0xff]
    %v902 = vld [vmem:[%s3 + $0x2f8] sm:$0xff]
    %v903 = vld [vmem:[%s3 + $0x300] sm:$0xff]
    %v904 = vld [vmem:[%s3 + $0x308] sm:$0xff]
    %v905 = vld [vmem:[%s3 + $0x310] sm:$0xff]
    %v906 = vld [vmem:[%s3 + $0x318] sm:$0xff]
    %v907 = vld [vmem:[%s3 + $0x320] sm:$0xff]
    %v908 = vld [vmem:[%s3 + $0x328] sm:$0xff]
    %v909 = vld [vmem:[%s3 + $0x330] sm:$0xff]
    %v910 = vld [vmem:[%s3 + $0x338] sm:$0xff]
    %v911 = vld [vmem:[%s3 + $0x340] sm:$0xff]
    %v912 = vld [vmem:[%s3 + $0x348] sm:$0xff]
    %v913 = vld [vmem:[%s3 + $0x350] sm:$0xff]
    %v914 = vld [vmem:[%s3 + $0x358] sm:$0xff]
    %v915 = vld [vmem:[%s3 + $0x360] sm:$0xff]
    %v916 = vld [vmem:[%s3 + $0x368] sm:$0xff]
    %v917 = vld [vmem:[%s3 + $0x370] sm:$0xff]
    %v918 = vld [vmem:[%s3 + $0x378] sm:$0xff]
    %v919 = vld [vmem:[%s3 + $0x380] sm:$0xff]
    %v920 = vld [vmem:[%s3 + $0x388] sm:$0xff]
    %v921 = vld [vmem:[%s3 + $0x390] sm:$0xff]
    %v922 = vld [vmem:[%s3 + $0x398] sm:$0xff]
    %v923 = vld [vmem:[%s4] sm:$0x3]
    %v925 = vperm.slane %v923, 0
    %v926 = vperm.slane %v923, 1
    %vm929 = vcmask 654336
    %v931 = vsel %vm929, %v806, 0
    %933 = vmatpush.msra.mxu0 %v837
    %934 = vmatpush.msra.mxu0 %v835
    %935 = vmatpush.msra.mxu0 %v833
    %936 = vmatpush.msra.mxu0 %v831
    %937 = vmatpush.msra.mxu0 %v829
    %938 = vmatpush.msra.mxu0 %v827
    %939 = vmatpush.msra.mxu0 %v825
    %940 = vmatpush.msra.mxu0 %v823
    %941 = vmatpush.msra.mxu0 %v821
    %942 = vmatpush.msra.mxu0 %v819
    %943 = vmatpush.msra.mxu0 %v817
    %944 = vmatpush.msra.mxu0 %v815
    %945 = vmatpush.msra.mxu0 %v813
    %946 = vmatpush.msra.mxu0 %v811
    %947 = vmatpush.msra.mxu0 %v809
    %948 = vmatpush.msra.mxu0 %v807
    %949 = vmatmul.f32.gmra.mxu0 %v803
    %v950 = vpop.f32.mrf.mxu0
    %v951 = vadd.f32 %v925, %v950
    %952 = vdwg.mxu0
    %953 = vmatpush.msra.mxu0 %v869
    %954 = vmatpush.msra.mxu0 %v867
    %955 = vmatpush.msra.mxu0 %v865
    %956 = vmatpush.msra.mxu0 %v863
    %957 = vmatpush.msra.mxu0 %v861
    %958 = vmatpush.msra.mxu0 %v859
    %959 = vmatpush.msra.mxu0 %v857
    %960 = vmatpush.msra.mxu0 %v855
    %961 = vmatpush.msra.mxu0 %v853
    %962 = vmatpush.msra.mxu0 %v851
    %963 = vmatpush.msra.mxu0 %v849
    %964 = vmatpush.msra.mxu0 %v847
    %965 = vmatpush.msra.mxu0 %v845
    %966 = vmatpush.msra.mxu0 %v843
    %967 = vmatpush.msra.mxu0 %v841
    %968 = vmatpush.msra.mxu0 %v839
    %969 = vmatmul.f32.gmra.mxu0 %v804
    %v970 = vpop.f32.mrf.mxu0
    %v971 = vadd.f32 %v951, %v970
    %972 = vdwg.mxu0
    %973 = vmatpush.msra.mxu0 %v901
    %974 = vmatpush.msra.mxu0 %v899
    %975 = vmatpush.msra.mxu0 %v897
    %976 = vmatpush.msra.mxu0 %v895
    %977 = vmatpush.msra.mxu0 %v893
    %978 = vmatpush.msra.mxu0 %v891
    %979 = vmatpush.msra.mxu0 %v889
    %980 = vmatpush.msra.mxu0 %v887
    %981 = vmatpush.msra.mxu0 %v885
    %982 = vmatpush.msra.mxu0 %v883
    %983 = vmatpush.msra.mxu0 %v881
    %984 = vmatpush.msra.mxu0 %v879
    %985 = vmatpush.msra.mxu0 %v877
    %986 = vmatpush.msra.mxu0 %v875
    %987 = vmatpush.msra.mxu0 %v873
    %988 = vmatpush.msra.mxu0 %v871
    %989 = vmatmul.f32.gmra.mxu0 %v805
    %v990 = vpop.f32.mrf.mxu0
    %v991 = vadd.f32 %v971, %v990
    %992 = vdwg.mxu0
    %993 = vmatpush.msra.mxu0 0.0
    %994 = vmatpush.msra.mxu0 0.0
    %995 = vmatpush.msra.mxu0 0.0
    %996 = vmatpush.msra.mxu0 0.0
    %997 = vmatpush.msra.mxu0 0.0
    %998 = vmatpush.msra.mxu0 0.0
    %999 = vmatpush.msra.mxu0 %v921
    %1000 = vmatpush.msra.mxu0 %v919
    %1001 = vmatpush.msra.mxu0 %v917
    %1002 = vmatpush.msra.mxu0 %v915
    %1003 = vmatpush.msra.mxu0 %v913
    %1004 = vmatpush.msra.mxu0 %v911
    %1005 = vmatpush.msra.mxu0 %v909
    %1006 = vmatpush.msra.mxu0 %v907
    %1007 = vmatpush.msra.mxu0 %v905
    %1008 = vmatpush.msra.mxu0 %v903
    %1009 = vmatmul.f32.gmra.mxu0 %v931
    %v1010 = vpop.f32.mrf.mxu0
    %v1011 = vadd.f32 %v991, %v1010
    %1012 = vdwg.mxu0
    %1013 = vmatpush.msra.mxu0 %v838
    %1014 = vmatpush.msra.mxu0 %v836
    %1015 = vmatpush.msra.mxu0 %v834
    %1016 = vmatpush.msra.mxu0 %v832
    %1017 = vmatpush.msra.mxu0 %v830
    %1018 = vmatpush.msra.mxu0 %v828
    %1019 = vmatpush.msra.mxu0 %v826
    %1020 = vmatpush.msra.mxu0 %v824
    %1021 = vmatpush.msra.mxu0 %v822
    %1022 = vmatpush.msra.mxu0 %v820
    %1023 = vmatpush.msra.mxu0 %v818
    %1024 = vmatpush.msra.mxu0 %v816
    %1025 = vmatpush.msra.mxu0 %v814
    %1026 = vmatpush.msra.mxu0 %v812
    %1027 = vmatpush.msra.mxu0 %v810
    %1028 = vmatpush.msra.mxu0 %v808
    %1029 = vmatmul.f32.gmra.mxu0 %v803
    %v1030 = vpop.f32.mrf.mxu0
    %v1031 = vadd.f32 %v926, %v1030
    %1032 = vdwg.mxu0
    %1033 = vmatpush.msra.mxu0 %v870
    %1034 = vmatpush.msra.mxu0 %v868
    %1035 = vmatpush.msra.mxu0 %v866
    %1036 = vmatpush.msra.mxu0 %v864
    %1037 = vmatpush.msra.mxu0 %v862
    %1038 = vmatpush.msra.mxu0 %v860
    %1039 = vmatpush.msra.mxu0 %v858
    %1040 = vmatpush.msra.mxu0 %v856
    %1041 = vmatpush.msra.mxu0 %v854
    %1042 = vmatpush.msra.mxu0 %v852
    %1043 = vmatpush.msra.mxu0 %v850
    %1044 = vmatpush.msra.mxu0 %v848
    %1045 = vmatpush.msra.mxu0 %v846
    %1046 = vmatpush.msra.mxu0 %v844
    %1047 = vmatpush.msra.mxu0 %v842
    %1048 = vmatpush.msra.mxu0 %v840
    %1049 = vmatmul.f32.gmra.mxu0 %v804
    %v1050 = vpop.f32.mrf.mxu0
    %v1051 = vadd.f32 %v1031, %v1050
    %1052 = vdwg.mxu0
    %1053 = vmatpush.msra.mxu0 %v902
    %1054 = vmatpush.msra.mxu0 %v900
    %1055 = vmatpush.msra.mxu0 %v898
    %1056 = vmatpush.msra.mxu0 %v896
    %1057 = vmatpush.msra.mxu0 %v894
    %1058 = vmatpush.msra.mxu0 %v892
    %1059 = vmatpush.msra.mxu0 %v890
    %1060 = vmatpush.msra.mxu0 %v888
    %1061 = vmatpush.msra.mxu0 %v886
    %1062 = vmatpush.msra.mxu0 %v884
    %1063 = vmatpush.msra.mxu0 %v882
    %1064 = vmatpush.msra.mxu0 %v880
    %1065 = vmatpush.msra.mxu0 %v878
    %1066 = vmatpush.msra.mxu0 %v876
    %1067 = vmatpush.msra.mxu0 %v874
    %1068 = vmatpush.msra.mxu0 %v872
    %1069 = vmatmul.f32.gmra.mxu0 %v805
    %v1070 = vpop.f32.mrf.mxu0
    %v1071 = vadd.f32 %v1051, %v1070
    %1072 = vdwg.mxu0
    %1073 = vmatpush.msra.mxu0 0.0
    %1074 = vmatpush.msra.mxu0 0.0
    %1075 = vmatpush.msra.mxu0 0.0
    %1076 = vmatpush.msra.mxu0 0.0
    %1077 = vmatpush.msra.mxu0 0.0
    %1078 = vmatpush.msra.mxu0 0.0
    %1079 = vmatpush.msra.mxu0 %v922
    %1080 = vmatpush.msra.mxu0 %v920
    %1081 = vmatpush.msra.mxu0 %v918
    %1082 = vmatpush.msra.mxu0 %v916
    %1083 = vmatpush.msra.mxu0 %v914
    %1084 = vmatpush.msra.mxu0 %v912
    %1085 = vmatpush.msra.mxu0 %v910
    %1086 = vmatpush.msra.mxu0 %v908
    %1087 = vmatpush.msra.mxu0 %v906
    %1088 = vmatpush.msra.mxu0 %v904
    %1089 = vmatmul.f32.gmra.mxu0 %v931
    %v1090 = vpop.f32.mrf.mxu0
    %v1091 = vadd.f32 %v1071, %v1090
    %1092 = vdwg.mxu0
    %v1093 = vmax.f32 %v1011, 0.0
    %v1094 = vmax.f32 %v1091, 0.0
    %1096 = vrot.lane.b32.xlu0 %v1093, 120
    %v1097 = vpop.permute.xlu0 %1096
    %v1099 = vmax.f32 %v1093, %v1097
    %1100 = vrot.lane.b32.xlu0 %v1093, 112
    %v1101 = vpop.permute.xlu0 %1100
    %v1103 = vmax.f32 %v1099, %v1101
    %1104 = vrot.lane.b32.xlu0 %v1093, 104
    %v1105 = vpop.permute.xlu0 %1104
    %v1107 = vmax.f32 %v1103, %v1105
    %1108 = vrot.lane.b32.xlu0 %v1093, 96
    %v1109 = vpop.permute.xlu0 %1108
    %v1111 = vmax.f32 %v1107, %v1109
    %1113 = vrot.lane.b32.xlu0 %v1093, 24
    %v1114 = vpop.permute.xlu0 %1113
    %1115 = vrot.lane.b32.xlu0 %v1094, 24
    %v1116 = vpop.permute.xlu0 %1115
    %vm1117 = vcmask 195584
    %v1118 = vsel %vm1117, %v1114, %v1116
    %v1120 = vmax.f32 %v1111, %v1118
    %1121 = vrot.lane.b32.xlu0 %v1093, 16
    %v1122 = vpop.permute.xlu0 %1121
    %1123 = vrot.lane.b32.xlu0 %v1094, 16
    %v1124 = vpop.permute.xlu0 %1123
    %v1125 = vsel %vm729, %v1122, %v1124
    %v1127 = vmax.f32 %v1120, %v1125
    %1128 = vrot.lane.b32.xlu0 %v1093, 8
    %v1129 = vpop.permute.xlu0 %1128
    %1130 = vrot.lane.b32.xlu0 %v1094, 8
    %v1131 = vpop.permute.xlu0 %1130
    %v1132 = vsel %vm752, %v1129, %v1131
    %v1134 = vmax.f32 %v1127, %v1132
    %v1135 = vmax.f32 %v1134, %v1094
    %1136 = vrot.lane.b32.xlu0 %v1094, 120
    %v1137 = vpop.permute.xlu0 %1136
    %v1139 = vmax.f32 %v1135, %v1137
    %v1140 = vld [vmem:[%s5] sm:$0xff]
    %v1141 = vld [vmem:[%s5 + $0x8] sm:$0xff]
    %v1142 = vld [vmem:[%s5 + $0x10] sm:$0xff]
    %v1143 = vld [vmem:[%s5 + $0x18] sm:$0xff]
    %v1144 = vld [vmem:[%s5 + $0x20] sm:$0xff]
    %v1145 = vld [vmem:[%s5 + $0x28] sm:$0xff]
    %v1146 = vld [vmem:[%s5 + $0x30] sm:$0xff]
    %v1147 = vld [vmem:[%s5 + $0x38] sm:$0xff]
    %v1148 = vld [vmem:[%s6] sm:$0x1]
    %v1150 = vperm.slane %v1148, 0
    %vm1152 = vcmask 523264
    %v1154 = vsel %vm1152, %v1139, 0
    %1156 = vmatpush.msra.mxu0 0.0
    %1157 = vmatpush.msra.mxu0 0.0
    %1158 = vmatpush.msra.mxu0 0.0
    %1159 = vmatpush.msra.mxu0 0.0
    %1160 = vmatpush.msra.mxu0 0.0
    %1161 = vmatpush.msra.mxu0 0.0
    %1162 = vmatpush.msra.mxu0 0.0
    %1163 = vmatpush.msra.mxu0 0.0
    %1164 = vmatpush.msra.mxu0 %v1147
    %1165 = vmatpush.msra.mxu0 %v1146
    %1166 = vmatpush.msra.mxu0 %v1145
    %1167 = vmatpush.msra.mxu0 %v1144
    %1168 = vmatpush.msra.mxu0 %v1143
    %1169 = vmatpush.msra.mxu0 %v1142
    %1170 = vmatpush.msra.mxu0 %v1141
    %1171 = vmatpush.msra.mxu0 %v1140
    %1172 = vmatmul.f32.gmra.mxu0 %v1154
    %v1173 = vpop.f32.mrf.mxu0
    %v1174 = vadd.f32 %v1150, %v1173
    %1175 = vdwg.mxu0
    %1176 = vst [vmem:[#allocation2] sm:$0xff] %v1174
    // Predicated region
    $region30: #{tpu_custom_call.1} parent=1 // pred_check
      _
    $region31: #{tpu_custom_call.1} parent=1 // pred_check_branch
      %1178 = sbr.rel (0) target = $region33
    $region32: #{tpu_custom_call.1} parent=1 // pred_region
      %1180 = vsyncadd [#allocation3], 0
      %s1182 = sshll.u32 [#allocation2], 4
      %s1183 = int_to_ptr.vmem [resolvable:$true] %s1182
      %s1184 = sshll.u32 %s7, 4
      %s1185 = int_to_ptr.hbm [resolvable:$true] %s1184
      %1187 = dma.vmem_to_hbm [thread:$0]  %s1183, 128, %s1185, [#allocation3]
    $region33: #{tpu_custom_call.1} parent=1 // pred_fallthru
      _
    // Predicated region
    $region34: #{tpu_custom_call.1} parent=1 // pred_check
      _
    $region35: #{tpu_custom_call.1} parent=1 // pred_check_branch
      %1189 = sbr.rel (0) target = $region37
    $region36: #{tpu_custom_call.1} parent=1 // pred_region
      %1191 = dma.done [#allocation3], 128
    $region37: #{tpu_custom_call.1} parent=1 // pred_fallthru
      _
    %1192 = vsyncpa [#allocation3], 1

</llo_original>
